<compile_context>
chip_gen: v5e
topology: v5e:2x2
jax: 0.10.0
libtpu: 0.0.40
codegen_flags: <defaults>
</compile_context>

<pallas_src>
import math

import jax
import jax.numpy as jnp
from jax.experimental import pallas as pl
from jax.experimental.pallas import tpu as pltpu


def _round_up(x, m):
    return ((x + m - 1) // m) * m


# ----------------------------------------------------------------------------
# Fast path: dim == 128 (one output row == one 128-lane vreg row).
# ----------------------------------------------------------------------------
def _sine_packed_kernel(off_ref, freq_ref, out_ref):
    """Packed sin/cos kernel for dim == 128.

    off_ref  : (r0, 128) f32  lane-major offsets; off_ref[r, l] is the offset of
                              output row r*128 + l of this tile.
    freq_ref : (1, 128)  f32  duplicated logspace: freq[2i] == freq[2i+1] == ls[i].
    out_ref  : (r0*128, 128)  interleaved [sin, cos, sin, cos, ...] rows.

    Per 128-row chunk the unique arguments are packed two output rows per row:
        arg[r, 2i]   = off[r]      * ls[i]     (chunk row r)
        arg[r, 2i+1] = off[r + 64] * ls[i]     (chunk row r + 64)
    so sin() and cos() run once per unique argument (half the EUP work of the
    naive even/odd-lane select).  The interleaved rows are rebuilt with cheap
    +-1 lane rotations + selects:
        out[r]      = where(even_lane, sin(arg),           roll(cos(arg), +1))
        out[r + 64] = where(even_lane, roll(sin(arg), -1), cos(arg))
    """
    half = 64
    r0 = off_ref.shape[0]
    freq = freq_ref[...]                                            # (1, 128)

    lane = jax.lax.broadcasted_iota(jnp.int32, (half, 128), 1)
    row = jax.lax.broadcasted_iota(jnp.int32, (half, 128), 0)
    even_lane = (lane & 1) == 0                                     # (64, 128)
    pick_a = lane == row                                            # lane r      -> row r
    pick_b = lane == (row + half)                                   # lane r + 64 -> row r

    for rb in range(r0):                                            # static unroll
        # Offsets of this 128-row chunk, broadcast across 64 sublanes.
        off_row = jnp.broadcast_to(off_ref[pl.ds(rb, 1), :], (half, 128))
        # Lanes -> sublanes spread via masked lane reductions (exact: one term).
        off_a = jnp.sum(jnp.where(pick_a, off_row, 0.0), axis=1, keepdims=True)
        off_b = jnp.sum(jnp.where(pick_b, off_row, 0.0), axis=1, keepdims=True)

        arg = jnp.where(even_lane, off_a, off_b) * freq             # (64, 128)
        s = jnp.sin(arg)
        c = jnp.cos(arg)

        # shift=1: lane l takes lane l-1;  shift=127 == -1 (mod 128).
        out_a = jnp.where(even_lane, s, pltpu.roll(c, shift=1, axis=1))
        out_b = jnp.where(even_lane, pltpu.roll(s, shift=127, axis=1), c)

        base = rb * 128
        out_ref[pl.ds(base, half), :] = out_a.astype(out_ref.dtype)
        out_ref[pl.ds(base + half, half), :] = out_b.astype(out_ref.dtype)


def _sine_packed(off_flat, freq, M, tile_rows, out_dtype):
    dim = 128
    # Rows per grid step: multiple of 128 (the kernel's chunk size), targeting
    # >= 8 grid steps (keeps both v7x TensorCores busy) while keeping tiles
    # large (<= tile_rows) to amortize the ~0.35us per-step overhead.
    tm = _round_up(pl.cdiv(M, 8), 128)
    tm = max(128, min(tm, _round_up(tile_rows, 128)))
    r0 = tm // 128

    # Output rows are exact (no pad + full-output reslice); only for M < 128
    # does the single block exceed M, and we slice off < 128 rows afterwards.
    m_out = max(M, tm)
    grid = (pl.cdiv(m_out, tm),)

    # Offsets lane-major: dense (n, 128) layout -> contiguous input DMA.
    m128 = _round_up(M, 128)
    if m128 != M:
        off_flat = jnp.pad(off_flat, (0, m128 - M))
    off2d = off_flat.reshape(m128 // 128, 128)

    cost = pl.CostEstimate(
        flops=4 * m_out * dim,
        transcendentals=m_out * dim,
        bytes_accessed=4 * m128 + 4 * dim
        + m_out * dim * jnp.dtype(out_dtype).itemsize,
    )

    out2d = pl.pallas_call(
        _sine_packed_kernel,
        out_shape=jax.ShapeDtypeStruct((m_out, dim), out_dtype),
        grid_spec=pltpu.PrefetchScalarGridSpec(
            num_scalar_prefetch=0,
            grid=grid,
            in_specs=[
                pl.BlockSpec((r0, 128), lambda i: (i, 0)),
                # constant block index -> fetched once, stays resident in VMEM
                pl.BlockSpec((1, dim), lambda i: (0, 0)),
            ],
            out_specs=pl.BlockSpec((tm, dim), lambda i: (i, 0)),
        ),
        compiler_params=pltpu.CompilerParams(
            dimension_semantics=("parallel",),
        ),
        cost_estimate=cost,
    )(off2d, freq)

    return out2d if m_out == M else out2d[:M]


# ----------------------------------------------------------------------------
# Generic fallback for dim != 128 (rarely used; correctness over peak perf).
# ----------------------------------------------------------------------------
def _sine_select_kernel(off_ref, freq_ref, out_ref):
    # off_ref: (tm, 1), freq_ref: (1, dim), out_ref: (tm, dim)
    arg = off_ref[...] * freq_ref[...]
    lane = jax.lax.broadcasted_iota(jnp.int32, arg.shape, 1)
    out = jnp.where((lane & 1) == 0, jnp.sin(arg), jnp.cos(arg))
    out_ref[...] = out.astype(out_ref.dtype)


def _sine_generic(off_flat, freq, M, dim, tile_rows, out_dtype):
    tm = max(8, _round_up(min(tile_rows, M), 8))
    m_pad = _round_up(M, tm)
    if m_pad != M:
        off_flat = jnp.pad(off_flat, (0, m_pad - M))
    off2d = off_flat.reshape(m_pad, 1)
    out2d = pl.pallas_call(
        _sine_select_kernel,
        out_shape=jax.ShapeDtypeStruct((m_pad, dim), out_dtype),
        grid_spec=pltpu.PrefetchScalarGridSpec(
            num_scalar_prefetch=0,
            grid=(m_pad // tm,),
            in_specs=[
                pl.BlockSpec((tm, 1), lambda i: (i, 0)),
                pl.BlockSpec((1, dim), lambda i: (0, 0)),
            ],
            out_specs=pl.BlockSpec((tm, dim), lambda i: (i, 0)),
        ),
        compiler_params=pltpu.CompilerParams(
            dimension_semantics=("parallel",),
        ),
    )(off2d, freq)
    return out2d if m_pad == M else out2d[:M]


def sine_transform(offset, dim=128, scale=2.0 * math.pi, tile_rows=4096,
                   out_dtype=jnp.float32):
    """Pallas TPU implementation of SineTransform.forward.

    offset: float array of any shape (...); returns (..., dim) with
      out[..., 2i] = sin(offset * logspace[i]), out[..., 2i+1] = cos(offset * logspace[i]).
    out_dtype=jnp.bfloat16 is a lower-precision fast path (halves HBM writeback);
    the default float32 matches the reference.
    """
    assert dim % 2 == 0, "embedding dim must be even"
    offset = jnp.asarray(offset)
    orig_shape = offset.shape
    M = math.prod(orig_shape) if orig_shape else 1
    off_flat = offset.reshape(M).astype(jnp.float32)

    # torch.logspace(start=1, end=-4, steps=dim//2, base=scale)
    logspace = jnp.power(
        jnp.float32(scale), jnp.linspace(1.0, -4.0, dim // 2, dtype=jnp.float32)
    )
    freq = jnp.repeat(logspace, 2).reshape(1, dim)   # freq[2i] == freq[2i+1] == ls[i]

    if dim == 128:
        out2d = _sine_packed(off_flat, freq, M, tile_rows, out_dtype)
    else:
        out2d = _sine_generic(off_flat, freq, M, dim, tile_rows, out_dtype)
    return out2d.reshape(*orig_shape, dim)


def _reference(offset, dim=128, scale=2.0 * math.pi):
    logspace = jnp.power(
        jnp.float32(scale), jnp.linspace(1.0, -4.0, dim // 2, dtype=jnp.float32)
    )
    pos = offset[..., None].astype(jnp.float32) * logspace      # (..., dim//2)
    z = jnp.stack([jnp.sin(pos), jnp.cos(pos)], axis=-1)        # (..., dim//2, 2)
    return z.reshape(*pos.shape[:-1], dim)                      # interleaved


if __name__ == "__main__":
    key = jax.random.PRNGKey(0)
    B, N, DIM = 2, 8, 128
    offset = jax.random.uniform(key, (B, N), jnp.float32, minval=0.0, maxval=100.0)

    out = jax.block_until_ready(sine_transform(offset, dim=DIM))
    ref = _reference(offset, dim=DIM)
    assert out.shape == (B, N, DIM)
    assert jnp.allclose(out, ref, atol=2e-5, rtol=2e-5), float(
        jnp.max(jnp.abs(out - ref))
    )

    # Ragged size: partial last output block (no output pad + reslice path).
    off2 = jax.random.uniform(
        jax.random.PRNGKey(1), (3, 50), jnp.float32, minval=0.0, maxval=100.0
    )
    out2 = jax.block_until_ready(sine_transform(off2, dim=DIM))
    ref2 = _reference(off2, dim=DIM)
    assert out2.shape == (3, 50, DIM)
    assert jnp.allclose(out2, ref2, atol=2e-5, rtol=2e-5), float(
        jnp.max(jnp.abs(out2 - ref2))
    )

    # Larger ragged size: multi-chunk tiles (r0 > 1), multi-step parallel grid,
    # partial final input and output blocks.
    off3 = jax.random.uniform(
        jax.random.PRNGKey(2), (3, 1000), jnp.float32, minval=0.0, maxval=100.0
    )
    out3 = jax.block_until_ready(sine_transform(off3, dim=DIM))
    ref3 = _reference(off3, dim=DIM)
    assert out3.shape == (3, 1000, DIM)
    assert jnp.allclose(out3, ref3, atol=2e-5, rtol=2e-5), float(
        jnp.max(jnp.abs(out3 - ref3))
    )

    print("KERNEL_OK")
</pallas_src>

<mosaic_0001>
module attributes {stable_mosaic.version = 11 : i64} {
  func.func @_sine_packed_kernel(%arg0: i32, %arg1: memref<1x128xf32, #tpu.memory_space<vmem>>, %arg2: memref<1x128xf32, #tpu.memory_space<vmem>>, %arg3: memref<128x128xf32, #tpu.memory_space<vmem>>) attributes {dimension_semantics = [#tpu.dimension_semantics<parallel>], iteration_bounds = array<i64: 1>, scalar_prefetch = 0 : i64, scratch_operands = 0 : i64, tpu.core_type = #tpu.core_type<tc>, window_params = [{transform_indices = @transform_0, window_bounds = array<i64: 1, 128>}, {pipeline_mode = #tpu.pipeline_mode<synchronous>, transform_indices = @transform_1, window_bounds = array<i64: 1, 128>}, {transform_indices = @transform_2, window_bounds = array<i64: 128, 128>}]} {
    %c0 = arith.constant 0 : index
    %c0_0 = arith.constant 0 : index
    %0 = vector.load %arg2[%c0, %c0_0] : memref<1x128xf32, #tpu.memory_space<vmem>>, vector<1x128xf32>
    %1 = tpu.iota {dimensions = array<i32: 1>} : vector<64x128xi32>
    %2 = tpu.iota {dimensions = array<i32: 0>} : vector<64x128xi32>
    %c1_i32 = arith.constant 1 : i32
    %3 = vector.broadcast %c1_i32 : i32 to vector<64x128xi32>
    %4 = arith.andi %1, %3 : vector<64x128xi32>
    %c0_i32 = arith.constant 0 : i32
    %5 = vector.broadcast %c0_i32 : i32 to vector<64x128xi32>
    %6 = arith.cmpi eq, %4, %5 : vector<64x128xi32>
    %7 = arith.cmpi eq, %1, %2 : vector<64x128xi32>
    %c64_i32 = arith.constant 64 : i32
    %8 = vector.broadcast %c64_i32 : i32 to vector<64x128xi32>
    %9 = arith.addi %2, %8 : vector<64x128xi32>
    %10 = arith.cmpi eq, %1, %9 : vector<64x128xi32>
    %c0_1 = arith.constant 0 : index
    %c0_2 = arith.constant 0 : index
    %11 = vector.load %arg1[%c0_1, %c0_2] : memref<1x128xf32, #tpu.memory_space<vmem>>, vector<1x128xf32>
    %12 = vector.shape_cast %11 : vector<1x128xf32> to vector<1x128xf32>
    %13 = vector.broadcast %12 : vector<1x128xf32> to vector<64x128xf32>
    %cst = arith.constant 0.000000e+00 : f32
    %14 = vector.broadcast %cst : f32 to vector<64x128xf32>
    %15 = arith.select %7, %13, %14 : vector<64x128xi1>, vector<64x128xf32>
    %cst_3 = arith.constant dense<0.000000e+00> : vector<64xf32>
    %16 = vector.multi_reduction <add>, %15, %cst_3 [1] : vector<64x128xf32> to vector<64xf32>
    %17 = vector.shape_cast %16 : vector<64xf32> to vector<64x1xf32>
    %cst_4 = arith.constant 0.000000e+00 : f32
    %18 = vector.broadcast %cst_4 : f32 to vector<64x128xf32>
    %19 = arith.select %10, %13, %18 : vector<64x128xi1>, vector<64x128xf32>
    %cst_5 = arith.constant dense<0.000000e+00> : vector<64xf32>
    %20 = vector.multi_reduction <add>, %19, %cst_5 [1] : vector<64x128xf32> to vector<64xf32>
    %21 = vector.shape_cast %20 : vector<64xf32> to vector<64x1xf32>
    %22 = vector.shape_cast %17 : vector<64x1xf32> to vector<64x1xf32>
    %23 = vector.broadcast %22 : vector<64x1xf32> to vector<64x128xf32>
    %24 = vector.shape_cast %21 : vector<64x1xf32> to vector<64x1xf32>
    %25 = vector.broadcast %24 : vector<64x1xf32> to vector<64x128xf32>
    %26 = arith.select %6, %23, %25 : vector<64x128xi1>, vector<64x128xf32>
    %27 = vector.broadcast %0 : vector<1x128xf32> to vector<64x128xf32>
    %28 = arith.mulf %26, %27 : vector<64x128xf32>
    %29 = math.sin %28 : vector<64x128xf32>
    %30 = math.cos %28 : vector<64x128xf32>
    %c1_i32_6 = arith.constant 1 : i32
    %31 = tpu.dynamic_rotate %30 by %c1_i32_6 dim 1 : vector<64x128xf32>, i32 -> vector<64x128xf32>
    %32 = arith.select %6, %29, %31 : vector<64x128xi1>, vector<64x128xf32>
    %c127_i32 = arith.constant 127 : i32
    %33 = tpu.dynamic_rotate %29 by %c127_i32 dim 1 : vector<64x128xf32>, i32 -> vector<64x128xf32>
    %34 = arith.select %6, %33, %30 : vector<64x128xi1>, vector<64x128xf32>
    %c0_7 = arith.constant 0 : index
    %c0_8 = arith.constant 0 : index
    %35 = vector.load %arg3[%c0_7, %c0_8] : memref<128x128xf32, #tpu.memory_space<vmem>>, vector<64x128xf32>
    tpu.vector_store %arg3[%c0_7, %c0_8], %32 {strides = array<i32>} : memref<128x128xf32, #tpu.memory_space<vmem>>, vector<64x128xf32>,
    %c64 = arith.constant 64 : index
    %c0_9 = arith.constant 0 : index
    %36 = vector.load %arg3[%c64, %c0_9] : memref<128x128xf32, #tpu.memory_space<vmem>>, vector<64x128xf32>
    tpu.vector_store %arg3[%c64, %c0_9], %34 {strides = array<i32>} : memref<128x128xf32, #tpu.memory_space<vmem>>, vector<64x128xf32>,
    return
  }
  func.func @transform_0(%arg0: i32) -> (i32, i32) {
    %c0_i32 = arith.constant 0 : i32
    %c0_i32_0 = arith.constant 0 : i32
    return %arg0, %c0_i32 : i32, i32
  }
  func.func @transform_1(%arg0: i32) -> (i32, i32) {
    %c0_i32 = arith.constant 0 : i32
    %c0_i32_0 = arith.constant 0 : i32
    %c0_i32_1 = arith.constant 0 : i32
    return %c0_i32, %c0_i32_0 : i32, i32
  }
  func.func @transform_2(%arg0: i32) -> (i32, i32) {
    %c0_i32 = arith.constant 0 : i32
    %c0_i32_0 = arith.constant 0 : i32
    return %arg0, %c0_i32 : i32, i32
  }
}

</mosaic_0001>

<llo_original>
// kernel: tpu_custom_call.1
$region0: #{tpu_custom_call.1}
  #allocation0 [shape = 'u32[]', space=smem, size = 0x4, offset = 0x4, fixed_abs, tag = 'smem constant byte address 0x4 - core index']
  #allocation1 [shape = 'u32[72,128]{1,0:T(1,128)}', space=vmem, size = 0x9000, scoped, tag = 'internal scratch']
  %s0 = inlined_call_operand.hbm [shape: f32[1,128], index: 0, kind: input, shape index: {}]
  %s1 = inlined_call_operand.hbm [shape: f32[1,128], index: 1, kind: input, shape index: {}]
  %s2 = inlined_call_operand.hbm [shape: f32[128,128], index: 2, kind: output, shape index: {}]
  %s3 = sld [smem:[#allocation0]]
  $region26: #{tpu_custom_call.1} parent=0
    _
  %s5 = ssub.s32 1, %s3
  %s6 = scalar_select 0, %s5, %s3
  $region1: #{tpu_custom_call.1} parent=0
    #allocation2 [shape = 'u8[512]{0}', space=vmem, size = 0x400, scoped, tag = 'input window, operand 0, single buffered']
    #allocation3 [shape = 's32[1]{0}', space=sflag, size = 0x4, scoped, tag = 'scoped memory for tpu_custom_call.1']
    #allocation4 [shape = 's32[1]{0}', space=sflag, size = 0x4, scoped, tag = 'scoped memory for tpu_custom_call.1']
    #allocation5 [shape = 'u8[512]{0}', space=vmem, size = 0x400, scoped, tag = 'input window, operand 1, single buffered']
    #allocation6 [shape = 's32[1]{0}', space=sflag, size = 0x4, scoped, tag = 'scoped memory for tpu_custom_call.1']
    #allocation7 [shape = 'u8[65536]{0}', space=vmem, size = 0x10000, scoped, tag = 'output window, operand 0, single buffered']
    %7 = vsyncpa [#allocation3], 0
    %8 = vsyncpa [#allocation6], 0
    %9 = vsyncpa [#allocation4], 0
    // Predicated region
    $region2: #{tpu_custom_call.1} parent=1 // pred_check
      _
    $region3: #{tpu_custom_call.1} parent=1 // pred_check_branch
      %11 = sbr.rel (0) target = $region5
    $region4: #{tpu_custom_call.1} parent=1 // pred_region
      %13 = vsyncadd [#allocation3], 0
      %s15 = sshll.u32 %s0, 4
      %s16 = int_to_ptr.hbm [resolvable:$true] %s15
      %s17 = sshll.u32 [#allocation2], 4
      %s18 = int_to_ptr.vmem [resolvable:$true] %s17
      %20 = dma.hbm_to_vmem [thread:$0]  %s16, 16, %s18, [#allocation3]
    $region5: #{tpu_custom_call.1} parent=1 // pred_fallthru
      _
    // Predicated region
    $region6: #{tpu_custom_call.1} parent=1 // pred_check
      _
    $region7: #{tpu_custom_call.1} parent=1 // pred_check_branch
      %22 = sbr.rel (0) target = $region9
    $region8: #{tpu_custom_call.1} parent=1 // pred_region
      %24 = vsyncadd [#allocation6], 0
      %s26 = sshll.u32 %s1, 4
      %s27 = int_to_ptr.hbm [resolvable:$true] %s26
      %s28 = sshll.u32 [#allocation5], 4
      %s29 = int_to_ptr.vmem [resolvable:$true] %s28
      %31 = dma.hbm_to_vmem [thread:$0]  %s27, 16, %s29, [#allocation6]
    $region9: #{tpu_custom_call.1} parent=1 // pred_fallthru
      _
    // Predicated region
    $region10: #{tpu_custom_call.1} parent=1 // pred_check
      _
    $region11: #{tpu_custom_call.1} parent=1 // pred_check_branch
      %33 = sbr.rel (0) target = $region13
    $region12: #{tpu_custom_call.1} parent=1 // pred_region
      %35 = dma.done [#allocation3], 16
    $region13: #{tpu_custom_call.1} parent=1 // pred_fallthru
      _
    // Predicated region
    $region14: #{tpu_custom_call.1} parent=1 // pred_check
      _
    $region15: #{tpu_custom_call.1} parent=1 // pred_check_branch
      %37 = sbr.rel (0) target = $region17
    $region16: #{tpu_custom_call.1} parent=1 // pred_region
      %39 = dma.done [#allocation6], 16
    $region17: #{tpu_custom_call.1} parent=1 // pred_fallthru
      _
    %v40 = vld [vmem:[#allocation5] sm:$0x1]
    %v41 = vlaneseq
    %v42 = vand.u32 %v41, 127
    %v43 = vlaneseq
    %v44 = vshrl.u32 %v43, 7
    %v45 = vadd.s32 %v44, 8
    %v46 = vadd.s32 %v44, 16
    %v47 = vadd.s32 %v44, 24
    %v48 = vadd.s32 %v44, 32
    %v49 = vadd.s32 %v44, 40
    %v50 = vadd.s32 %v44, 48
    %v51 = vadd.s32 %v44, 56
    %v52 = vand.u32 %v42, 1
    %vm53 = vcmp.eq.s32.totalorder %v52, 0
    %vm54 = vcmp.eq.s32.totalorder %v42, %v44
    %vm55 = vcmp.eq.s32.totalorder %v42, %v45
    %vm56 = vcmp.eq.s32.totalorder %v42, %v46
    %vm57 = vcmp.eq.s32.totalorder %v42, %v47
    %vm58 = vcmp.eq.s32.totalorder %v42, %v48
    %vm59 = vcmp.eq.s32.totalorder %v42, %v49
    %vm60 = vcmp.eq.s32.totalorder %v42, %v50
    %vm61 = vcmp.eq.s32.totalorder %v42, %v51
    %v62 = vadd.s32 %v44, 64
    %v63 = vadd.s32 %v45, 64
    %v64 = vadd.s32 %v46, 64
    %v65 = vadd.s32 %v47, 64
    %v66 = vadd.s32 %v48, 64
    %v67 = vadd.s32 %v49, 64
    %v68 = vadd.s32 %v50, 64
    %v69 = vadd.s32 %v51, 64
    %vm70 = vcmp.eq.s32.totalorder %v42, %v62
    %vm71 = vcmp.eq.s32.totalorder %v42, %v63
    %vm72 = vcmp.eq.s32.totalorder %v42, %v64
    %vm73 = vcmp.eq.s32.totalorder %v42, %v65
    %vm74 = vcmp.eq.s32.totalorder %v42, %v66
    %vm75 = vcmp.eq.s32.totalorder %v42, %v67
    %vm76 = vcmp.eq.s32.totalorder %v42, %v68
    %vm77 = vcmp.eq.s32.totalorder %v42, %v69
    %v78 = vld [vmem:[#allocation2] sm:$0x1]
    %v80 = vperm.slane %v78, 0
    %v82 = vsel %vm54, %v80, 0.0
    %v83 = vsel %vm55, %v80, 0.0
    %v84 = vsel %vm56, %v80, 0.0
    %v85 = vsel %vm57, %v80, 0.0
    %v86 = vsel %vm58, %v80, 0.0
    %v87 = vsel %vm59, %v80, 0.0
    %v88 = vsel %vm60, %v80, 0.0
    %v89 = vsel %vm61, %v80, 0.0
    %90 = vadd.xlane.f32.xlu0 %v82
    %v91 = vpop.xlane.xlu0 %90
    %92 = vadd.xlane.f32.xlu0 %v83
    %v93 = vpop.xlane.xlu0 %92
    %94 = vadd.xlane.f32.xlu0 %v84
    %v95 = vpop.xlane.xlu0 %94
    %96 = vadd.xlane.f32.xlu0 %v85
    %v97 = vpop.xlane.xlu0 %96
    %98 = vadd.xlane.f32.xlu0 %v86
    %v99 = vpop.xlane.xlu0 %98
    %100 = vadd.xlane.f32.xlu0 %v87
    %v101 = vpop.xlane.xlu0 %100
    %102 = vadd.xlane.f32.xlu0 %v88
    %v103 = vpop.xlane.xlu0 %102
    %104 = vadd.xlane.f32.xlu0 %v89
    %v105 = vpop.xlane.xlu0 %104
    %v106 = vsel %vm70, %v80, 0.0
    %v107 = vsel %vm71, %v80, 0.0
    %v108 = vsel %vm72, %v80, 0.0
    %v109 = vsel %vm73, %v80, 0.0
    %v110 = vsel %vm74, %v80, 0.0
    %v111 = vsel %vm75, %v80, 0.0
    %v112 = vsel %vm76, %v80, 0.0
    %v113 = vsel %vm77, %v80, 0.0
    %114 = vadd.xlane.f32.xlu0 %v106
    %v115 = vpop.xlane.xlu0 %114
    %116 = vadd.xlane.f32.xlu0 %v107
    %v117 = vpop.xlane.xlu0 %116
    %118 = vadd.xlane.f32.xlu0 %v108
    %v119 = vpop.xlane.xlu0 %118
    %120 = vadd.xlane.f32.xlu0 %v109
    %v121 = vpop.xlane.xlu0 %120
    %122 = vadd.xlane.f32.xlu0 %v110
    %v123 = vpop.xlane.xlu0 %122
    %124 = vadd.xlane.f32.xlu0 %v111
    %v125 = vpop.xlane.xlu0 %124
    %126 = vadd.xlane.f32.xlu0 %v112
    %v127 = vpop.xlane.xlu0 %126
    %128 = vadd.xlane.f32.xlu0 %v113
    %v129 = vpop.xlane.xlu0 %128
    %v130 = vsel %vm53, %v91, %v115
    %v131 = vsel %vm53, %v93, %v117
    %v132 = vsel %vm53, %v95, %v119
    %v133 = vsel %vm53, %v97, %v121
    %v134 = vsel %vm53, %v99, %v123
    %v135 = vsel %vm53, %v101, %v125
    %v136 = vsel %vm53, %v103, %v127
    %v137 = vsel %vm53, %v105, %v129
    %v139 = vperm.slane %v40, 0
    %v141 = vmul.f32 %v130, %v139
    %v142 = vmul.f32 %v131, %v139
    %v143 = vmul.f32 %v132, %v139
    %v144 = vmul.f32 %v133, %v139
    %v145 = vmul.f32 %v134, %v139
    %v146 = vmul.f32 %v135, %v139
    %v147 = vmul.f32 %v136, %v139
    %v148 = vmul.f32 %v137, %v139
    %v149 = vand.u32 2147483647, %v141
    %vm150 = vcmp.le.f32.partialorder %v149, 0.7853982
    %vm151 = vcmp.lt.s32.totalorder %v141, 0
    %v152 = vand.u32 %v141, 2139095040
    %v153 = vshrl.u32 %v152, 23
    %v154 = vsub.s32 %v153, 127
    %v155 = vand.u32 2147483647, %v141
    %v156 = vand.u32 %v155, 8388607
    %v157 = vor.u32 %v156, 8388608
    %v158 = vsub.s32 0, %v157
    %v159 = vadd.s32 %v154, 1
    %vm160 = vcmp.gt.s32.totalorder %v159, 0
    %v161 = vsel %vm160, %v159, 0
    %v162 = vshrl.u32 %v161, 5
    %v163 = vand.u32 %v161, 31
    %v164 = vsub.s32 32, %v163
    %v165 = vshrl.u32 683565275, %v164
    %v166 = vshll.u32 683565275, %v163
    %v167 = vshrl.u32 2475754826, %v164
    %v168 = vor.u32 %v166, %v167
    %v169 = vshll.u32 2475754826, %v163
    %v170 = vshrl.u32 2131351028, %v164
    %v171 = vor.u32 %v169, %v170
    %v172 = vshll.u32 2131351028, %v163
    %v173 = vshrl.u32 2102212464, %v164
    %v174 = vor.u32 %v172, %v173
    %v175 = vshll.u32 2102212464, %v163
    %v176 = vshrl.u32 920167782, %v164
    %v177 = vor.u32 %v175, %v176
    %v178 = vshll.u32 920167782, %v163
    %v179 = vshrl.u32 1326507024, %v164
    %v180 = vor.u32 %v178, %v179
    %vm181 = vcmp.lt.s32.totalorder %v162, 1
    %vm182 = vcmp.lt.s32.totalorder %v162, 2
    %vm183 = vcmp.lt.s32.totalorder %v162, 3
    %vm184 = vcmp.lt.s32.totalorder %v162, 4
    %v185 = vsel %vm181, %v165, %v168
    %v186 = vsel %vm184, %v174, 2102212464
    %v187 = vsel %vm183, %v171, %v186
    %v188 = vsel %vm182, %v185, %v187
    %v189 = vsel %vm181, %v168, %v171
    %v190 = vsel %vm184, %v177, 920167782
    %v191 = vsel %vm183, %v174, %v190
    %v192 = vsel %vm182, %v189, %v191
    %v193 = vsel %vm181, %v171, %v174
    %v194 = vsel %vm184, %v180, 1326507024
    %v195 = vsel %vm183, %v177, %v194
    %v196 = vsel %vm182, %v193, %v195
    %v197 = vshll.u32 %v157, 8
    %v198 = vand.u32 %v197, 65535
    %v199 = vshrl.u32 %v197, 16
    %v200 = vand.u32 %v196, 65535
    %v201 = vshrl.u32 %v196, 16
    %v202 = vmul.u32 %v198, %v200
    %v203 = vmul.u32 %v198, %v201
    %v204 = vmul.u32 %v199, %v200
    %v205 = vmul.u32 %v199, %v201
    %v206 = vshll.u32 %v203, 16
    %v207 = vshrl.u32 %v203, 16
    %v208 = vshll.u32 %v204, 16
    %v209 = vshrl.u32 %v204, 16
    %vm210 = vc.u32 %v202, %v206
    %v211 = vsel %vm210, 1, 0
    %v212 = vadd.s32 %v202, %v206
    %v213 = vadd.s32 %v205, %v211
    %vm214 = vc.u32 %v212, %v208
    %v215 = vsel %vm214, 1, 0
    %v216 = vadd.s32 %v212, %v208
    %v217 = vadd.s32 %v213, %v215
    %v218 = vadd.s32 %v217, %v207
    %v219 = vadd.s32 %v218, %v209
    %v220 = vand.u32 %v197, 65535
    %v221 = vshrl.u32 %v197, 16
    %v222 = vand.u32 %v192, 65535
    %v223 = vshrl.u32 %v192, 16
    %v224 = vmul.u32 %v220, %v222
    %v225 = vmul.u32 %v220, %v223
    %v226 = vmul.u32 %v221, %v222
    %v227 = vmul.u32 %v221, %v223
    %v228 = vshll.u32 %v225, 16
    %v229 = vshrl.u32 %v225, 16
    %v230 = vshll.u32 %v226, 16
    %v231 = vshrl.u32 %v226, 16
    %vm232 = vc.u32 %v224, %v228
    %v233 = vsel %vm232, 1, 0
    %v234 = vadd.s32 %v224, %v228
    %v235 = vadd.s32 %v227, %v233
    %vm236 = vc.u32 %v234, %v230
    %v237 = vsel %vm236, 1, 0
    %v238 = vadd.s32 %v234, %v230
    %v239 = vadd.s32 %v235, %v237
    %v240 = vadd.s32 %v239, %v229
    %v241 = vadd.s32 %v240, %v231
    %v242 = vmul.u32 %v197, %v188
    %v243 = vadd.s32 %v219, %v238
    %vm244 = vc.u32 %v219, %v238
    %v245 = vadd.s32 %v241, 1
    %v246 = vsel %vm244, %v245, %v241
    %v247 = vadd.s32 %v242, %v246
    %v248 = vadd.s32 %v247, 536870912
    %v249 = vshrl.u32 %v248, 30
    %v250 = vshll.u32 %v249, 30
    %v251 = vsub.s32 %v247, %v250
    %vm252 = vcmp.lt.s32.totalorder %v251, 0
    %v253 = vsub.s32 0, %v251
    %v254 = vsel %vm252, %v253, %v251
    %v255 = vclz %v254
    %v256 = vsub.s32 %v255, 2
    %vm257 = vcmp.gt.s32.totalorder 0, %v256
    %v258 = vsel %vm257, 0, %v256
    %v259 = vsub.s32 32, %v258
    %v260 = vshll.u32 %v251, %v258
    %v261 = vshrl.u32 %v243, %v259
    %v262 = vor.u32 %v260, %v261
    %v263 = vsub.s32 4294967266, %v258
    %v264 = vadd.s32 %v263, 127
    %v265 = vshll.u32 %v264, 23
    %v266 = vor.u32 4788187, %v265
    %v267 = vand.u32 2147483647, %v266
    %v269 = vcvt.s32.f32 %v262
    %v270 = vmul.f32 %v269, %v267
    %v271 = vxor.u32 %v270, 2147483648
    %v272 = vsel %vm151, %v271, %v270
    %v273 = vsub.s32 4, %v249
    %v274 = vsel %vm151, %v273, %v249
    %v275 = vsel %vm150, %v141, %v272
    %v276 = vsel %vm150, 0, %v274
    %v277 = vmul.f32 %v275, %v275
    %v278 = vmul.f32 %v277, -0.001358992
    %v279 = vadd.f32 %v278, 0.041655596
    %v280 = vmul.f32 %v277, %v279
    %v281 = vadd.f32 %v280, -0.4999988
    %v282 = vmul.f32 %v277, %v281
    %v283 = vadd.f32 1.0, %v282
    %v284 = vmul.f32 %v275, %v275
    %v285 = vmul.f32 %v284, -0.00019511016
    %v286 = vadd.f32 %v285, 0.008332121
    %v287 = vmul.f32 %v284, %v286
    %v288 = vadd.f32 %v287, -0.16666654
    %v289 = vmul.f32 %v284, %v288
    %v290 = vadd.f32 %v289, 1.0
    %v291 = vmul.f32 %v290, %v275
    %vm292 = vweird.f32 %v141
    %v293 = vadd.s32 %v276, 3
    %v294 = vand.u32 %v293, 3
    %vm295 = vcmp.lt.s32.totalorder %v294, 2
    %vm296 = vcmp.eq.s32.totalorder %v294, 0
    %v297 = vxor.u32 %v291, 2147483648
    %v298 = vsel %vm296, %v283, %v297
    %vm299 = vcmp.eq.s32.totalorder %v294, 2
    %v300 = vxor.u32 %v283, 2147483648
    %v301 = vsel %vm299, %v300, %v291
    %v302 = vsel %vm295, %v298, %v301
    %v303 = vsel %vm292, nan, %v302
    %v304 = vand.u32 2147483647, %v142
    %vm305 = vcmp.le.f32.partialorder %v304, 0.7853982
    %vm306 = vcmp.lt.s32.totalorder %v142, 0
    %v307 = vand.u32 %v142, 2139095040
    %v308 = vshrl.u32 %v307, 23
    %v309 = vsub.s32 %v308, 127
    %v310 = vand.u32 2147483647, %v142
    %v311 = vand.u32 %v310, 8388607
    %v312 = vor.u32 %v311, 8388608
    %v313 = vsub.s32 0, %v312
    %v314 = vadd.s32 %v309, 1
    %vm315 = vcmp.gt.s32.totalorder %v314, 0
    %v316 = vsel %vm315, %v314, 0
    %v317 = vshrl.u32 %v316, 5
    %v318 = vand.u32 %v316, 31
    %v319 = vsub.s32 32, %v318
    %v320 = vshrl.u32 683565275, %v319
    %v321 = vshll.u32 683565275, %v318
    %v322 = vshrl.u32 2475754826, %v319
    %v323 = vor.u32 %v321, %v322
    %v324 = vshll.u32 2475754826, %v318
    %v325 = vshrl.u32 2131351028, %v319
    %v326 = vor.u32 %v324, %v325
    %v327 = vshll.u32 2131351028, %v318
    %v328 = vshrl.u32 2102212464, %v319
    %v329 = vor.u32 %v327, %v328
    %v330 = vshll.u32 2102212464, %v318
    %v331 = vshrl.u32 920167782, %v319
    %v332 = vor.u32 %v330, %v331
    %v333 = vshll.u32 920167782, %v318
    %v334 = vshrl.u32 1326507024, %v319
    %v335 = vor.u32 %v333, %v334
    %vm336 = vcmp.lt.s32.totalorder %v317, 1
    %vm337 = vcmp.lt.s32.totalorder %v317, 2
    %vm338 = vcmp.lt.s32.totalorder %v317, 3
    %vm339 = vcmp.lt.s32.totalorder %v317, 4
    %v340 = vsel %vm336, %v320, %v323
    %v341 = vsel %vm339, %v329, 2102212464
    %v342 = vsel %vm338, %v326, %v341
    %v343 = vsel %vm337, %v340, %v342
    %v344 = vsel %vm336, %v323, %v326
    %v345 = vsel %vm339, %v332, 920167782
    %v346 = vsel %vm338, %v329, %v345
    %v347 = vsel %vm337, %v344, %v346
    %v348 = vsel %vm336, %v326, %v329
    %v349 = vsel %vm339, %v335, 1326507024
    %v350 = vsel %vm338, %v332, %v349
    %v351 = vsel %vm337, %v348, %v350
    %v352 = vshll.u32 %v312, 8
    %v353 = vand.u32 %v352, 65535
    %v354 = vshrl.u32 %v352, 16
    %v355 = vand.u32 %v351, 65535
    %v356 = vshrl.u32 %v351, 16
    %v357 = vmul.u32 %v353, %v355
    %v358 = vmul.u32 %v353, %v356
    %v359 = vmul.u32 %v354, %v355
    %v360 = vmul.u32 %v354, %v356
    %v361 = vshll.u32 %v358, 16
    %v362 = vshrl.u32 %v358, 16
    %v363 = vshll.u32 %v359, 16
    %v364 = vshrl.u32 %v359, 16
    %vm365 = vc.u32 %v357, %v361
    %v366 = vsel %vm365, 1, 0
    %v367 = vadd.s32 %v357, %v361
    %v368 = vadd.s32 %v360, %v366
    %vm369 = vc.u32 %v367, %v363
    %v370 = vsel %vm369, 1, 0
    %v371 = vadd.s32 %v367, %v363
    %v372 = vadd.s32 %v368, %v370
    %v373 = vadd.s32 %v372, %v362
    %v374 = vadd.s32 %v373, %v364
    %v375 = vand.u32 %v352, 65535
    %v376 = vshrl.u32 %v352, 16
    %v377 = vand.u32 %v347, 65535
    %v378 = vshrl.u32 %v347, 16
    %v379 = vmul.u32 %v375, %v377
    %v380 = vmul.u32 %v375, %v378
    %v381 = vmul.u32 %v376, %v377
    %v382 = vmul.u32 %v376, %v378
    %v383 = vshll.u32 %v380, 16
    %v384 = vshrl.u32 %v380, 16
    %v385 = vshll.u32 %v381, 16
    %v386 = vshrl.u32 %v381, 16
    %vm387 = vc.u32 %v379, %v383
    %v388 = vsel %vm387, 1, 0
    %v389 = vadd.s32 %v379, %v383
    %v390 = vadd.s32 %v382, %v388
    %vm391 = vc.u32 %v389, %v385
    %v392 = vsel %vm391, 1, 0
    %v393 = vadd.s32 %v389, %v385
    %v394 = vadd.s32 %v390, %v392
    %v395 = vadd.s32 %v394, %v384
    %v396 = vadd.s32 %v395, %v386
    %v397 = vmul.u32 %v352, %v343
    %v398 = vadd.s32 %v374, %v393
    %vm399 = vc.u32 %v374, %v393
    %v400 = vadd.s32 %v396, 1
    %v401 = vsel %vm399, %v400, %v396
    %v402 = vadd.s32 %v397, %v401
    %v403 = vadd.s32 %v402, 536870912
    %v404 = vshrl.u32 %v403, 30
    %v405 = vshll.u32 %v404, 30
    %v406 = vsub.s32 %v402, %v405
    %vm407 = vcmp.lt.s32.totalorder %v406, 0
    %v408 = vsub.s32 0, %v406
    %v409 = vsel %vm407, %v408, %v406
    %v410 = vclz %v409
    %v411 = vsub.s32 %v410, 2
    %vm412 = vcmp.gt.s32.totalorder 0, %v411
    %v413 = vsel %vm412, 0, %v411
    %v414 = vsub.s32 32, %v413
    %v415 = vshll.u32 %v406, %v413
    %v416 = vshrl.u32 %v398, %v414
    %v417 = vor.u32 %v415, %v416
    %v418 = vsub.s32 4294967266, %v413
    %v419 = vadd.s32 %v418, 127
    %v420 = vshll.u32 %v419, 23
    %v421 = vor.u32 4788187, %v420
    %v422 = vand.u32 2147483647, %v421
    %v424 = vcvt.s32.f32 %v417
    %v425 = vmul.f32 %v424, %v422
    %v426 = vxor.u32 %v425, 2147483648
    %v427 = vsel %vm306, %v426, %v425
    %v428 = vsub.s32 4, %v404
    %v429 = vsel %vm306, %v428, %v404
    %v430 = vsel %vm305, %v142, %v427
    %v431 = vsel %vm305, 0, %v429
    %v432 = vmul.f32 %v430, %v430
    %v433 = vmul.f32 %v432, -0.001358992
    %v434 = vadd.f32 %v433, 0.041655596
    %v435 = vmul.f32 %v432, %v434
    %v436 = vadd.f32 %v435, -0.4999988
    %v437 = vmul.f32 %v432, %v436
    %v438 = vadd.f32 1.0, %v437
    %v439 = vmul.f32 %v430, %v430
    %v440 = vmul.f32 %v439, -0.00019511016
    %v441 = vadd.f32 %v440, 0.008332121
    %v442 = vmul.f32 %v439, %v441
    %v443 = vadd.f32 %v442, -0.16666654
    %v444 = vmul.f32 %v439, %v443
    %v445 = vadd.f32 %v444, 1.0
    %v446 = vmul.f32 %v445, %v430
    %vm447 = vweird.f32 %v142
    %v448 = vadd.s32 %v431, 3
    %v449 = vand.u32 %v448, 3
    %vm450 = vcmp.lt.s32.totalorder %v449, 2
    %vm451 = vcmp.eq.s32.totalorder %v449, 0
    %v452 = vxor.u32 %v446, 2147483648
    %v453 = vsel %vm451, %v438, %v452
    %vm454 = vcmp.eq.s32.totalorder %v449, 2
    %v455 = vxor.u32 %v438, 2147483648
    %v456 = vsel %vm454, %v455, %v446
    %v457 = vsel %vm450, %v453, %v456
    %v458 = vsel %vm447, nan, %v457
    %v459 = vand.u32 2147483647, %v143
    %vm460 = vcmp.le.f32.partialorder %v459, 0.7853982
    %vm461 = vcmp.lt.s32.totalorder %v143, 0
    %v462 = vand.u32 %v143, 2139095040
    %v463 = vshrl.u32 %v462, 23
    %v464 = vsub.s32 %v463, 127
    %v465 = vand.u32 2147483647, %v143
    %v466 = vand.u32 %v465, 8388607
    %v467 = vor.u32 %v466, 8388608
    %v468 = vsub.s32 0, %v467
    %v469 = vadd.s32 %v464, 1
    %vm470 = vcmp.gt.s32.totalorder %v469, 0
    %v471 = vsel %vm470, %v469, 0
    %v472 = vshrl.u32 %v471, 5
    %v473 = vand.u32 %v471, 31
    %v474 = vsub.s32 32, %v473
    %v475 = vshrl.u32 683565275, %v474
    %v476 = vshll.u32 683565275, %v473
    %v477 = vshrl.u32 2475754826, %v474
    %v478 = vor.u32 %v476, %v477
    %v479 = vshll.u32 2475754826, %v473
    %v480 = vshrl.u32 2131351028, %v474
    %v481 = vor.u32 %v479, %v480
    %v482 = vshll.u32 2131351028, %v473
    %v483 = vshrl.u32 2102212464, %v474
    %v484 = vor.u32 %v482, %v483
    %v485 = vshll.u32 2102212464, %v473
    %v486 = vshrl.u32 920167782, %v474
    %v487 = vor.u32 %v485, %v486
    %v488 = vshll.u32 920167782, %v473
    %v489 = vshrl.u32 1326507024, %v474
    %v490 = vor.u32 %v488, %v489
    %vm491 = vcmp.lt.s32.totalorder %v472, 1
    %vm492 = vcmp.lt.s32.totalorder %v472, 2
    %vm493 = vcmp.lt.s32.totalorder %v472, 3
    %vm494 = vcmp.lt.s32.totalorder %v472, 4
    %v495 = vsel %vm491, %v475, %v478
    %v496 = vsel %vm494, %v484, 2102212464
    %v497 = vsel %vm493, %v481, %v496
    %v498 = vsel %vm492, %v495, %v497
    %v499 = vsel %vm491, %v478, %v481
    %v500 = vsel %vm494, %v487, 920167782
    %v501 = vsel %vm493, %v484, %v500
    %v502 = vsel %vm492, %v499, %v501
    %v503 = vsel %vm491, %v481, %v484
    %v504 = vsel %vm494, %v490, 1326507024
    %v505 = vsel %vm493, %v487, %v504
    %v506 = vsel %vm492, %v503, %v505
    %v507 = vshll.u32 %v467, 8
    %v508 = vand.u32 %v507, 65535
    %v509 = vshrl.u32 %v507, 16
    %v510 = vand.u32 %v506, 65535
    %v511 = vshrl.u32 %v506, 16
    %v512 = vmul.u32 %v508, %v510
    %v513 = vmul.u32 %v508, %v511
    %v514 = vmul.u32 %v509, %v510
    %v515 = vmul.u32 %v509, %v511
    %v516 = vshll.u32 %v513, 16
    %v517 = vshrl.u32 %v513, 16
    %v518 = vshll.u32 %v514, 16
    %v519 = vshrl.u32 %v514, 16
    %vm520 = vc.u32 %v512, %v516
    %v521 = vsel %vm520, 1, 0
    %v522 = vadd.s32 %v512, %v516
    %v523 = vadd.s32 %v515, %v521
    %vm524 = vc.u32 %v522, %v518
    %v525 = vsel %vm524, 1, 0
    %v526 = vadd.s32 %v522, %v518
    %v527 = vadd.s32 %v523, %v525
    %v528 = vadd.s32 %v527, %v517
    %v529 = vadd.s32 %v528, %v519
    %v530 = vand.u32 %v507, 65535
    %v531 = vshrl.u32 %v507, 16
    %v532 = vand.u32 %v502, 65535
    %v533 = vshrl.u32 %v502, 16
    %v534 = vmul.u32 %v530, %v532
    %v535 = vmul.u32 %v530, %v533
    %v536 = vmul.u32 %v531, %v532
    %v537 = vmul.u32 %v531, %v533
    %v538 = vshll.u32 %v535, 16
    %v539 = vshrl.u32 %v535, 16
    %v540 = vshll.u32 %v536, 16
    %v541 = vshrl.u32 %v536, 16
    %vm542 = vc.u32 %v534, %v538
    %v543 = vsel %vm542, 1, 0
    %v544 = vadd.s32 %v534, %v538
    %v545 = vadd.s32 %v537, %v543
    %vm546 = vc.u32 %v544, %v540
    %v547 = vsel %vm546, 1, 0
    %v548 = vadd.s32 %v544, %v540
    %v549 = vadd.s32 %v545, %v547
    %v550 = vadd.s32 %v549, %v539
    %v551 = vadd.s32 %v550, %v541
    %v552 = vmul.u32 %v507, %v498
    %v553 = vadd.s32 %v529, %v548
    %vm554 = vc.u32 %v529, %v548
    %v555 = vadd.s32 %v551, 1
    %v556 = vsel %vm554, %v555, %v551
    %v557 = vadd.s32 %v552, %v556
    %v558 = vadd.s32 %v557, 536870912
    %v559 = vshrl.u32 %v558, 30
    %v560 = vshll.u32 %v559, 30
    %v561 = vsub.s32 %v557, %v560
    %vm562 = vcmp.lt.s32.totalorder %v561, 0
    %v563 = vsub.s32 0, %v561
    %v564 = vsel %vm562, %v563, %v561
    %v565 = vclz %v564
    %v566 = vsub.s32 %v565, 2
    %vm567 = vcmp.gt.s32.totalorder 0, %v566
    %v568 = vsel %vm567, 0, %v566
    %v569 = vsub.s32 32, %v568
    %v570 = vshll.u32 %v561, %v568
    %v571 = vshrl.u32 %v553, %v569
    %v572 = vor.u32 %v570, %v571
    %v573 = vsub.s32 4294967266, %v568
    %v574 = vadd.s32 %v573, 127
    %v575 = vshll.u32 %v574, 23
    %v576 = vor.u32 4788187, %v575
    %v577 = vand.u32 2147483647, %v576
    %v579 = vcvt.s32.f32 %v572
    %v580 = vmul.f32 %v579, %v577
    %v581 = vxor.u32 %v580, 2147483648
    %v582 = vsel %vm461, %v581, %v580
    %v583 = vsub.s32 4, %v559
    %v584 = vsel %vm461, %v583, %v559
    %v585 = vsel %vm460, %v143, %v582
    %v586 = vsel %vm460, 0, %v584
    %v587 = vmul.f32 %v585, %v585
    %v588 = vmul.f32 %v587, -0.001358992
    %v589 = vadd.f32 %v588, 0.041655596
    %v590 = vmul.f32 %v587, %v589
    %v591 = vadd.f32 %v590, -0.4999988
    %v592 = vmul.f32 %v587, %v591
    %v593 = vadd.f32 1.0, %v592
    %v594 = vmul.f32 %v585, %v585
    %v595 = vmul.f32 %v594, -0.00019511016
    %v596 = vadd.f32 %v595, 0.008332121
    %v597 = vmul.f32 %v594, %v596
    %v598 = vadd.f32 %v597, -0.16666654
    %v599 = vmul.f32 %v594, %v598
    %v600 = vadd.f32 %v599, 1.0
    %v601 = vmul.f32 %v600, %v585
    %vm602 = vweird.f32 %v143
    %v603 = vadd.s32 %v586, 3
    %v604 = vand.u32 %v603, 3
    %vm605 = vcmp.lt.s32.totalorder %v604, 2
    %vm606 = vcmp.eq.s32.totalorder %v604, 0
    %v607 = vxor.u32 %v601, 2147483648
    %v608 = vsel %vm606, %v593, %v607
    %vm609 = vcmp.eq.s32.totalorder %v604, 2
    %v610 = vxor.u32 %v593, 2147483648
    %v611 = vsel %vm609, %v610, %v601
    %v612 = vsel %vm605, %v608, %v611
    %v613 = vsel %vm602, nan, %v612
    %v614 = vand.u32 2147483647, %v144
    %vm615 = vcmp.le.f32.partialorder %v614, 0.7853982
    %vm616 = vcmp.lt.s32.totalorder %v144, 0
    %v617 = vand.u32 %v144, 2139095040
    %v618 = vshrl.u32 %v617, 23
    %v619 = vsub.s32 %v618, 127
    %v620 = vand.u32 2147483647, %v144
    %v621 = vand.u32 %v620, 8388607
    %v622 = vor.u32 %v621, 8388608
    %v623 = vsub.s32 0, %v622
    %v624 = vadd.s32 %v619, 1
    %vm625 = vcmp.gt.s32.totalorder %v624, 0
    %v626 = vsel %vm625, %v624, 0
    %v627 = vshrl.u32 %v626, 5
    %v628 = vand.u32 %v626, 31
    %v629 = vsub.s32 32, %v628
    %v630 = vshrl.u32 683565275, %v629
    %v631 = vshll.u32 683565275, %v628
    %v632 = vshrl.u32 2475754826, %v629
    %v633 = vor.u32 %v631, %v632
    %v634 = vshll.u32 2475754826, %v628
    %v635 = vshrl.u32 2131351028, %v629
    %v636 = vor.u32 %v634, %v635
    %v637 = vshll.u32 2131351028, %v628
    %v638 = vshrl.u32 2102212464, %v629
    %v639 = vor.u32 %v637, %v638
    %v640 = vshll.u32 2102212464, %v628
    %v641 = vshrl.u32 920167782, %v629
    %v642 = vor.u32 %v640, %v641
    %v643 = vshll.u32 920167782, %v628
    %v644 = vshrl.u32 1326507024, %v629
    %v645 = vor.u32 %v643, %v644
    %vm646 = vcmp.lt.s32.totalorder %v627, 1
    %vm647 = vcmp.lt.s32.totalorder %v627, 2
    %vm648 = vcmp.lt.s32.totalorder %v627, 3
    %vm649 = vcmp.lt.s32.totalorder %v627, 4
    %v650 = vsel %vm646, %v630, %v633
    %v651 = vsel %vm649, %v639, 2102212464
    %v652 = vsel %vm648, %v636, %v651
    %v653 = vsel %vm647, %v650, %v652
    %v654 = vsel %vm646, %v633, %v636
    %v655 = vsel %vm649, %v642, 920167782
    %v656 = vsel %vm648, %v639, %v655
    %v657 = vsel %vm647, %v654, %v656
    %v658 = vsel %vm646, %v636, %v639
    %v659 = vsel %vm649, %v645, 1326507024
    %v660 = vsel %vm648, %v642, %v659
    %v661 = vsel %vm647, %v658, %v660
    %v662 = vshll.u32 %v622, 8
    %v663 = vand.u32 %v662, 65535
    %v664 = vshrl.u32 %v662, 16
    %v665 = vand.u32 %v661, 65535
    %v666 = vshrl.u32 %v661, 16
    %v667 = vmul.u32 %v663, %v665
    %v668 = vmul.u32 %v663, %v666
    %v669 = vmul.u32 %v664, %v665
    %v670 = vmul.u32 %v664, %v666
    %v671 = vshll.u32 %v668, 16
    %v672 = vshrl.u32 %v668, 16
    %v673 = vshll.u32 %v669, 16
    %v674 = vshrl.u32 %v669, 16
    %vm675 = vc.u32 %v667, %v671
    %v676 = vsel %vm675, 1, 0
    %v677 = vadd.s32 %v667, %v671
    %v678 = vadd.s32 %v670, %v676
    %vm679 = vc.u32 %v677, %v673
    %v680 = vsel %vm679, 1, 0
    %v681 = vadd.s32 %v677, %v673
    %v682 = vadd.s32 %v678, %v680
    %v683 = vadd.s32 %v682, %v672
    %v684 = vadd.s32 %v683, %v674
    %v685 = vand.u32 %v662, 65535
    %v686 = vshrl.u32 %v662, 16
    %v687 = vand.u32 %v657, 65535
    %v688 = vshrl.u32 %v657, 16
    %v689 = vmul.u32 %v685, %v687
    %v690 = vmul.u32 %v685, %v688
    %v691 = vmul.u32 %v686, %v687
    %v692 = vmul.u32 %v686, %v688
    %v693 = vshll.u32 %v690, 16
    %v694 = vshrl.u32 %v690, 16
    %v695 = vshll.u32 %v691, 16
    %v696 = vshrl.u32 %v691, 16
    %vm697 = vc.u32 %v689, %v693
    %v698 = vsel %vm697, 1, 0
    %v699 = vadd.s32 %v689, %v693
    %v700 = vadd.s32 %v692, %v698
    %vm701 = vc.u32 %v699, %v695
    %v702 = vsel %vm701, 1, 0
    %v703 = vadd.s32 %v699, %v695
    %v704 = vadd.s32 %v700, %v702
    %v705 = vadd.s32 %v704, %v694
    %v706 = vadd.s32 %v705, %v696
    %v707 = vmul.u32 %v662, %v653
    %v708 = vadd.s32 %v684, %v703
    %vm709 = vc.u32 %v684, %v703
    %v710 = vadd.s32 %v706, 1
    %v711 = vsel %vm709, %v710, %v706
    %v712 = vadd.s32 %v707, %v711
    %v713 = vadd.s32 %v712, 536870912
    %v714 = vshrl.u32 %v713, 30
    %v715 = vshll.u32 %v714, 30
    %v716 = vsub.s32 %v712, %v715
    %vm717 = vcmp.lt.s32.totalorder %v716, 0
    %v718 = vsub.s32 0, %v716
    %v719 = vsel %vm717, %v718, %v716
    %v720 = vclz %v719
    %v721 = vsub.s32 %v720, 2
    %vm722 = vcmp.gt.s32.totalorder 0, %v721
    %v723 = vsel %vm722, 0, %v721
    %v724 = vsub.s32 32, %v723
    %v725 = vshll.u32 %v716, %v723
    %v726 = vshrl.u32 %v708, %v724
    %v727 = vor.u32 %v725, %v726
    %v728 = vsub.s32 4294967266, %v723
    %v729 = vadd.s32 %v728, 127
    %v730 = vshll.u32 %v729, 23
    %v731 = vor.u32 4788187, %v730
    %v732 = vand.u32 2147483647, %v731
    %v734 = vcvt.s32.f32 %v727
    %v735 = vmul.f32 %v734, %v732
    %v736 = vxor.u32 %v735, 2147483648
    %v737 = vsel %vm616, %v736, %v735
    %v738 = vsub.s32 4, %v714
    %v739 = vsel %vm616, %v738, %v714
    %v740 = vsel %vm615, %v144, %v737
    %v741 = vsel %vm615, 0, %v739
    %v742 = vmul.f32 %v740, %v740
    %v743 = vmul.f32 %v742, -0.001358992
    %v744 = vadd.f32 %v743, 0.041655596
    %v745 = vmul.f32 %v742, %v744
    %v746 = vadd.f32 %v745, -0.4999988
    %v747 = vmul.f32 %v742, %v746
    %v748 = vadd.f32 1.0, %v747
    %v749 = vmul.f32 %v740, %v740
    %v750 = vmul.f32 %v749, -0.00019511016
    %v751 = vadd.f32 %v750, 0.008332121
    %v752 = vmul.f32 %v749, %v751
    %v753 = vadd.f32 %v752, -0.16666654
    %v754 = vmul.f32 %v749, %v753
    %v755 = vadd.f32 %v754, 1.0
    %v756 = vmul.f32 %v755, %v740
    %vm757 = vweird.f32 %v144
    %v758 = vadd.s32 %v741, 3
    %v759 = vand.u32 %v758, 3
    %vm760 = vcmp.lt.s32.totalorder %v759, 2
    %vm761 = vcmp.eq.s32.totalorder %v759, 0
    %v762 = vxor.u32 %v756, 2147483648
    %v763 = vsel %vm761, %v748, %v762
    %vm764 = vcmp.eq.s32.totalorder %v759, 2
    %v765 = vxor.u32 %v748, 2147483648
    %v766 = vsel %vm764, %v765, %v756
    %v767 = vsel %vm760, %v763, %v766
    %v768 = vsel %vm757, nan, %v767
    %v769 = vand.u32 2147483647, %v145
    %vm770 = vcmp.le.f32.partialorder %v769, 0.7853982
    %vm771 = vcmp.lt.s32.totalorder %v145, 0
    %v772 = vand.u32 %v145, 2139095040
    %v773 = vshrl.u32 %v772, 23
    %v774 = vsub.s32 %v773, 127
    %v775 = vand.u32 2147483647, %v145
    %v776 = vand.u32 %v775, 8388607
    %v777 = vor.u32 %v776, 8388608
    %v778 = vsub.s32 0, %v777
    %v779 = vadd.s32 %v774, 1
    %vm780 = vcmp.gt.s32.totalorder %v779, 0
    %v781 = vsel %vm780, %v779, 0
    %v782 = vshrl.u32 %v781, 5
    %v783 = vand.u32 %v781, 31
    %v784 = vsub.s32 32, %v783
    %v785 = vshrl.u32 683565275, %v784
    %v786 = vshll.u32 683565275, %v783
    %v787 = vshrl.u32 2475754826, %v784
    %v788 = vor.u32 %v786, %v787
    %v789 = vshll.u32 2475754826, %v783
    %v790 = vshrl.u32 2131351028, %v784
    %v791 = vor.u32 %v789, %v790
    %v792 = vshll.u32 2131351028, %v783
    %v793 = vshrl.u32 2102212464, %v784
    %v794 = vor.u32 %v792, %v793
    %v795 = vshll.u32 2102212464, %v783
    %v796 = vshrl.u32 920167782, %v784
    %v797 = vor.u32 %v795, %v796
    %v798 = vshll.u32 920167782, %v783
    %v799 = vshrl.u32 1326507024, %v784
    %v800 = vor.u32 %v798, %v799
    %vm801 = vcmp.lt.s32.totalorder %v782, 1
    %vm802 = vcmp.lt.s32.totalorder %v782, 2
    %vm803 = vcmp.lt.s32.totalorder %v782, 3
    %vm804 = vcmp.lt.s32.totalorder %v782, 4
    %v805 = vsel %vm801, %v785, %v788
    %v806 = vsel %vm804, %v794, 2102212464
    %v807 = vsel %vm803, %v791, %v806
    %v808 = vsel %vm802, %v805, %v807
    %v809 = vsel %vm801, %v788, %v791
    %v810 = vsel %vm804, %v797, 920167782
    %v811 = vsel %vm803, %v794, %v810
    %v812 = vsel %vm802, %v809, %v811
    %v813 = vsel %vm801, %v791, %v794
    %v814 = vsel %vm804, %v800, 1326507024
    %v815 = vsel %vm803, %v797, %v814
    %v816 = vsel %vm802, %v813, %v815
    %v817 = vshll.u32 %v777, 8
    %v818 = vand.u32 %v817, 65535
    %v819 = vshrl.u32 %v817, 16
    %v820 = vand.u32 %v816, 65535
    %v821 = vshrl.u32 %v816, 16
    %v822 = vmul.u32 %v818, %v820
    %v823 = vmul.u32 %v818, %v821
    %v824 = vmul.u32 %v819, %v820
    %v825 = vmul.u32 %v819, %v821
    %v826 = vshll.u32 %v823, 16
    %v827 = vshrl.u32 %v823, 16
    %v828 = vshll.u32 %v824, 16
    %v829 = vshrl.u32 %v824, 16
    %vm830 = vc.u32 %v822, %v826
    %v831 = vsel %vm830, 1, 0
    %v832 = vadd.s32 %v822, %v826
    %v833 = vadd.s32 %v825, %v831
    %vm834 = vc.u32 %v832, %v828
    %v835 = vsel %vm834, 1, 0
    %v836 = vadd.s32 %v832, %v828
    %v837 = vadd.s32 %v833, %v835
    %v838 = vadd.s32 %v837, %v827
    %v839 = vadd.s32 %v838, %v829
    %v840 = vand.u32 %v817, 65535
    %v841 = vshrl.u32 %v817, 16
    %v842 = vand.u32 %v812, 65535
    %v843 = vshrl.u32 %v812, 16
    %v844 = vmul.u32 %v840, %v842
    %v845 = vmul.u32 %v840, %v843
    %v846 = vmul.u32 %v841, %v842
    %v847 = vmul.u32 %v841, %v843
    %v848 = vshll.u32 %v845, 16
    %v849 = vshrl.u32 %v845, 16
    %v850 = vshll.u32 %v846, 16
    %v851 = vshrl.u32 %v846, 16
    %vm852 = vc.u32 %v844, %v848
    %v853 = vsel %vm852, 1, 0
    %v854 = vadd.s32 %v844, %v848
    %v855 = vadd.s32 %v847, %v853
    %vm856 = vc.u32 %v854, %v850
    %v857 = vsel %vm856, 1, 0
    %v858 = vadd.s32 %v854, %v850
    %v859 = vadd.s32 %v855, %v857
    %v860 = vadd.s32 %v859, %v849
    %v861 = vadd.s32 %v860, %v851
    %v862 = vmul.u32 %v817, %v808
    %v863 = vadd.s32 %v839, %v858
    %vm864 = vc.u32 %v839, %v858
    %v865 = vadd.s32 %v861, 1
    %v866 = vsel %vm864, %v865, %v861
    %v867 = vadd.s32 %v862, %v866
    %v868 = vadd.s32 %v867, 536870912
    %v869 = vshrl.u32 %v868, 30
    %v870 = vshll.u32 %v869, 30
    %v871 = vsub.s32 %v867, %v870
    %vm872 = vcmp.lt.s32.totalorder %v871, 0
    %v873 = vsub.s32 0, %v871
    %v874 = vsel %vm872, %v873, %v871
    %v875 = vclz %v874
    %v876 = vsub.s32 %v875, 2
    %vm877 = vcmp.gt.s32.totalorder 0, %v876
    %v878 = vsel %vm877, 0, %v876
    %v879 = vsub.s32 32, %v878
    %v880 = vshll.u32 %v871, %v878
    %v881 = vshrl.u32 %v863, %v879
    %v882 = vor.u32 %v880, %v881
    %v883 = vsub.s32 4294967266, %v878
    %v884 = vadd.s32 %v883, 127
    %v885 = vshll.u32 %v884, 23
    %v886 = vor.u32 4788187, %v885
    %v887 = vand.u32 2147483647, %v886
    %v889 = vcvt.s32.f32 %v882
    %v890 = vmul.f32 %v889, %v887
    %v891 = vxor.u32 %v890, 2147483648
    %v892 = vsel %vm771, %v891, %v890
    %v893 = vsub.s32 4, %v869
    %v894 = vsel %vm771, %v893, %v869
    %v895 = vsel %vm770, %v145, %v892
    %v896 = vsel %vm770, 0, %v894
    %v897 = vmul.f32 %v895, %v895
    %v898 = vmul.f32 %v897, -0.001358992
    %v899 = vadd.f32 %v898, 0.041655596
    %v900 = vmul.f32 %v897, %v899
    %v901 = vadd.f32 %v900, -0.4999988
    %v902 = vmul.f32 %v897, %v901
    %v903 = vadd.f32 1.0, %v902
    %v904 = vmul.f32 %v895, %v895
    %v905 = vmul.f32 %v904, -0.00019511016
    %v906 = vadd.f32 %v905, 0.008332121
    %v907 = vmul.f32 %v904, %v906
    %v908 = vadd.f32 %v907, -0.16666654
    %v909 = vmul.f32 %v904, %v908
    %v910 = vadd.f32 %v909, 1.0
    %v911 = vmul.f32 %v910, %v895
    %vm912 = vweird.f32 %v145
    %v913 = vadd.s32 %v896, 3
    %v914 = vand.u32 %v913, 3
    %vm915 = vcmp.lt.s32.totalorder %v914, 2
    %vm916 = vcmp.eq.s32.totalorder %v914, 0
    %v917 = vxor.u32 %v911, 2147483648
    %v918 = vsel %vm916, %v903, %v917
    %vm919 = vcmp.eq.s32.totalorder %v914, 2
    %v920 = vxor.u32 %v903, 2147483648
    %v921 = vsel %vm919, %v920, %v911
    %v922 = vsel %vm915, %v918, %v921
    %v923 = vsel %vm912, nan, %v922
    %v924 = vand.u32 2147483647, %v146
    %vm925 = vcmp.le.f32.partialorder %v924, 0.7853982
    %vm926 = vcmp.lt.s32.totalorder %v146, 0
    %v927 = vand.u32 %v146, 2139095040
    %v928 = vshrl.u32 %v927, 23
    %v929 = vsub.s32 %v928, 127
    %v930 = vand.u32 2147483647, %v146
    %v931 = vand.u32 %v930, 8388607
    %v932 = vor.u32 %v931, 8388608
    %v933 = vsub.s32 0, %v932
    %v934 = vadd.s32 %v929, 1
    %vm935 = vcmp.gt.s32.totalorder %v934, 0
    %v936 = vsel %vm935, %v934, 0
    %v937 = vshrl.u32 %v936, 5
    %v938 = vand.u32 %v936, 31
    %v939 = vsub.s32 32, %v938
    %v940 = vshrl.u32 683565275, %v939
    %v941 = vshll.u32 683565275, %v938
    %v942 = vshrl.u32 2475754826, %v939
    %v943 = vor.u32 %v941, %v942
    %v944 = vshll.u32 2475754826, %v938
    %v945 = vshrl.u32 2131351028, %v939
    %v946 = vor.u32 %v944, %v945
    %v947 = vshll.u32 2131351028, %v938
    %v948 = vshrl.u32 2102212464, %v939
    %v949 = vor.u32 %v947, %v948
    %v950 = vshll.u32 2102212464, %v938
    %v951 = vshrl.u32 920167782, %v939
    %v952 = vor.u32 %v950, %v951
    %v953 = vshll.u32 920167782, %v938
    %v954 = vshrl.u32 1326507024, %v939
    %v955 = vor.u32 %v953, %v954
    %vm956 = vcmp.lt.s32.totalorder %v937, 1
    %vm957 = vcmp.lt.s32.totalorder %v937, 2
    %vm958 = vcmp.lt.s32.totalorder %v937, 3
    %vm959 = vcmp.lt.s32.totalorder %v937, 4
    %v960 = vsel %vm956, %v940, %v943
    %v961 = vsel %vm959, %v949, 2102212464
    %v962 = vsel %vm958, %v946, %v961
    %v963 = vsel %vm957, %v960, %v962
    %v964 = vsel %vm956, %v943, %v946
    %v965 = vsel %vm959, %v952, 920167782
    %v966 = vsel %vm958, %v949, %v965
    %v967 = vsel %vm957, %v964, %v966
    %v968 = vsel %vm956, %v946, %v949
    %v969 = vsel %vm959, %v955, 1326507024
    %v970 = vsel %vm958, %v952, %v969
    %v971 = vsel %vm957, %v968, %v970
    %v972 = vshll.u32 %v932, 8
    %v973 = vand.u32 %v972, 65535
    %v974 = vshrl.u32 %v972, 16
    %v975 = vand.u32 %v971, 65535
    %v976 = vshrl.u32 %v971, 16
    %v977 = vmul.u32 %v973, %v975
    %v978 = vmul.u32 %v973, %v976
    %v979 = vmul.u32 %v974, %v975
    %v980 = vmul.u32 %v974, %v976
    %v981 = vshll.u32 %v978, 16
    %v982 = vshrl.u32 %v978, 16
    %v983 = vshll.u32 %v979, 16
    %v984 = vshrl.u32 %v979, 16
    %vm985 = vc.u32 %v977, %v981
    %v986 = vsel %vm985, 1, 0
    %v987 = vadd.s32 %v977, %v981
    %v988 = vadd.s32 %v980, %v986
    %vm989 = vc.u32 %v987, %v983
    %v990 = vsel %vm989, 1, 0
    %v991 = vadd.s32 %v987, %v983
    %v992 = vadd.s32 %v988, %v990
    %v993 = vadd.s32 %v992, %v982
    %v994 = vadd.s32 %v993, %v984
    %v995 = vand.u32 %v972, 65535
    %v996 = vshrl.u32 %v972, 16
    %v997 = vand.u32 %v967, 65535
    %v998 = vshrl.u32 %v967, 16
    %v999 = vmul.u32 %v995, %v997
    %v1000 = vmul.u32 %v995, %v998
    %v1001 = vmul.u32 %v996, %v997
    %v1002 = vmul.u32 %v996, %v998
    %v1003 = vshll.u32 %v1000, 16
    %v1004 = vshrl.u32 %v1000, 16
    %v1005 = vshll.u32 %v1001, 16
    %v1006 = vshrl.u32 %v1001, 16
    %vm1007 = vc.u32 %v999, %v1003
    %v1008 = vsel %vm1007, 1, 0
    %v1009 = vadd.s32 %v999, %v1003
    %v1010 = vadd.s32 %v1002, %v1008
    %vm1011 = vc.u32 %v1009, %v1005
    %v1012 = vsel %vm1011, 1, 0
    %v1013 = vadd.s32 %v1009, %v1005
    %v1014 = vadd.s32 %v1010, %v1012
    %v1015 = vadd.s32 %v1014, %v1004
    %v1016 = vadd.s32 %v1015, %v1006
    %v1017 = vmul.u32 %v972, %v963
    %v1018 = vadd.s32 %v994, %v1013
    %vm1019 = vc.u32 %v994, %v1013
    %v1020 = vadd.s32 %v1016, 1
    %v1021 = vsel %vm1019, %v1020, %v1016
    %v1022 = vadd.s32 %v1017, %v1021
    %v1023 = vadd.s32 %v1022, 536870912
    %v1024 = vshrl.u32 %v1023, 30
    %v1025 = vshll.u32 %v1024, 30
    %v1026 = vsub.s32 %v1022, %v1025
    %vm1027 = vcmp.lt.s32.totalorder %v1026, 0
    %v1028 = vsub.s32 0, %v1026
    %v1029 = vsel %vm1027, %v1028, %v1026
    %v1030 = vclz %v1029
    %v1031 = vsub.s32 %v1030, 2
    %vm1032 = vcmp.gt.s32.totalorder 0, %v1031
    %v1033 = vsel %vm1032, 0, %v1031
    %v1034 = vsub.s32 32, %v1033
    %v1035 = vshll.u32 %v1026, %v1033
    %v1036 = vshrl.u32 %v1018, %v1034
    %v1037 = vor.u32 %v1035, %v1036
    %v1038 = vsub.s32 4294967266, %v1033
    %v1039 = vadd.s32 %v1038, 127
    %v1040 = vshll.u32 %v1039, 23
    %v1041 = vor.u32 4788187, %v1040
    %v1042 = vand.u32 2147483647, %v1041
    %v1044 = vcvt.s32.f32 %v1037
    %v1045 = vmul.f32 %v1044, %v1042
    %v1046 = vxor.u32 %v1045, 2147483648
    %v1047 = vsel %vm926, %v1046, %v1045
    %v1048 = vsub.s32 4, %v1024
    %v1049 = vsel %vm926, %v1048, %v1024
    %v1050 = vsel %vm925, %v146, %v1047
    %v1051 = vsel %vm925, 0, %v1049
    %v1052 = vmul.f32 %v1050, %v1050
    %v1053 = vmul.f32 %v1052, -0.001358992
    %v1054 = vadd.f32 %v1053, 0.041655596
    %v1055 = vmul.f32 %v1052, %v1054
    %v1056 = vadd.f32 %v1055, -0.4999988
    %v1057 = vmul.f32 %v1052, %v1056
    %v1058 = vadd.f32 1.0, %v1057
    %v1059 = vmul.f32 %v1050, %v1050
    %v1060 = vmul.f32 %v1059, -0.00019511016
    %v1061 = vadd.f32 %v1060, 0.008332121
    %v1062 = vmul.f32 %v1059, %v1061
    %v1063 = vadd.f32 %v1062, -0.16666654
    %v1064 = vmul.f32 %v1059, %v1063
    %v1065 = vadd.f32 %v1064, 1.0
    %v1066 = vmul.f32 %v1065, %v1050
    %vm1067 = vweird.f32 %v146
    %v1068 = vadd.s32 %v1051, 3
    %v1069 = vand.u32 %v1068, 3
    %vm1070 = vcmp.lt.s32.totalorder %v1069, 2
    %vm1071 = vcmp.eq.s32.totalorder %v1069, 0
    %v1072 = vxor.u32 %v1066, 2147483648
    %v1073 = vsel %vm1071, %v1058, %v1072
    %vm1074 = vcmp.eq.s32.totalorder %v1069, 2
    %v1075 = vxor.u32 %v1058, 2147483648
    %v1076 = vsel %vm1074, %v1075, %v1066
    %v1077 = vsel %vm1070, %v1073, %v1076
    %v1078 = vsel %vm1067, nan, %v1077
    %v1079 = vand.u32 2147483647, %v147
    %vm1080 = vcmp.le.f32.partialorder %v1079, 0.7853982
    %vm1081 = vcmp.lt.s32.totalorder %v147, 0
    %v1082 = vand.u32 %v147, 2139095040
    %v1083 = vshrl.u32 %v1082, 23
    %v1084 = vsub.s32 %v1083, 127
    %v1085 = vand.u32 2147483647, %v147
    %v1086 = vand.u32 %v1085, 8388607
    %v1087 = vor.u32 %v1086, 8388608
    %v1088 = vsub.s32 0, %v1087
    %v1089 = vadd.s32 %v1084, 1
    %vm1090 = vcmp.gt.s32.totalorder %v1089, 0
    %v1091 = vsel %vm1090, %v1089, 0
    %v1092 = vshrl.u32 %v1091, 5
    %v1093 = vand.u32 %v1091, 31
    %v1094 = vsub.s32 32, %v1093
    %v1095 = vshrl.u32 683565275, %v1094
    %v1096 = vshll.u32 683565275, %v1093
    %v1097 = vshrl.u32 2475754826, %v1094
    %v1098 = vor.u32 %v1096, %v1097
    %v1099 = vshll.u32 2475754826, %v1093
    %v1100 = vshrl.u32 2131351028, %v1094
    %v1101 = vor.u32 %v1099, %v1100
    %v1102 = vshll.u32 2131351028, %v1093
    %v1103 = vshrl.u32 2102212464, %v1094
    %v1104 = vor.u32 %v1102, %v1103
    %v1105 = vshll.u32 2102212464, %v1093
    %v1106 = vshrl.u32 920167782, %v1094
    %v1107 = vor.u32 %v1105, %v1106
    %v1108 = vshll.u32 920167782, %v1093
    %v1109 = vshrl.u32 1326507024, %v1094
    %v1110 = vor.u32 %v1108, %v1109
    %vm1111 = vcmp.lt.s32.totalorder %v1092, 1
    %vm1112 = vcmp.lt.s32.totalorder %v1092, 2
    %vm1113 = vcmp.lt.s32.totalorder %v1092, 3
    %vm1114 = vcmp.lt.s32.totalorder %v1092, 4
    %v1115 = vsel %vm1111, %v1095, %v1098
    %v1116 = vsel %vm1114, %v1104, 2102212464
    %v1117 = vsel %vm1113, %v1101, %v1116
    %v1118 = vsel %vm1112, %v1115, %v1117
    %v1119 = vsel %vm1111, %v1098, %v1101
    %v1120 = vsel %vm1114, %v1107, 920167782
    %v1121 = vsel %vm1113, %v1104, %v1120
    %v1122 = vsel %vm1112, %v1119, %v1121
    %v1123 = vsel %vm1111, %v1101, %v1104
    %v1124 = vsel %vm1114, %v1110, 1326507024
    %v1125 = vsel %vm1113, %v1107, %v1124
    %v1126 = vsel %vm1112, %v1123, %v1125
    %v1127 = vshll.u32 %v1087, 8
    %v1128 = vand.u32 %v1127, 65535
    %v1129 = vshrl.u32 %v1127, 16
    %v1130 = vand.u32 %v1126, 65535
    %v1131 = vshrl.u32 %v1126, 16
    %v1132 = vmul.u32 %v1128, %v1130
    %v1133 = vmul.u32 %v1128, %v1131
    %v1134 = vmul.u32 %v1129, %v1130
    %v1135 = vmul.u32 %v1129, %v1131
    %v1136 = vshll.u32 %v1133, 16
    %v1137 = vshrl.u32 %v1133, 16
    %v1138 = vshll.u32 %v1134, 16
    %v1139 = vshrl.u32 %v1134, 16
    %vm1140 = vc.u32 %v1132, %v1136
    %v1141 = vsel %vm1140, 1, 0
    %v1142 = vadd.s32 %v1132, %v1136
    %v1143 = vadd.s32 %v1135, %v1141
    %vm1144 = vc.u32 %v1142, %v1138
    %v1145 = vsel %vm1144, 1, 0
    %v1146 = vadd.s32 %v1142, %v1138
    %v1147 = vadd.s32 %v1143, %v1145
    %v1148 = vadd.s32 %v1147, %v1137
    %v1149 = vadd.s32 %v1148, %v1139
    %v1150 = vand.u32 %v1127, 65535
    %v1151 = vshrl.u32 %v1127, 16
    %v1152 = vand.u32 %v1122, 65535
    %v1153 = vshrl.u32 %v1122, 16
    %v1154 = vmul.u32 %v1150, %v1152
    %v1155 = vmul.u32 %v1150, %v1153
    %v1156 = vmul.u32 %v1151, %v1152
    %v1157 = vmul.u32 %v1151, %v1153
    %v1158 = vshll.u32 %v1155, 16
    %v1159 = vshrl.u32 %v1155, 16
    %v1160 = vshll.u32 %v1156, 16
    %v1161 = vshrl.u32 %v1156, 16
    %vm1162 = vc.u32 %v1154, %v1158
    %v1163 = vsel %vm1162, 1, 0
    %v1164 = vadd.s32 %v1154, %v1158
    %v1165 = vadd.s32 %v1157, %v1163
    %vm1166 = vc.u32 %v1164, %v1160
    %v1167 = vsel %vm1166, 1, 0
    %v1168 = vadd.s32 %v1164, %v1160
    %v1169 = vadd.s32 %v1165, %v1167
    %v1170 = vadd.s32 %v1169, %v1159
    %v1171 = vadd.s32 %v1170, %v1161
    %v1172 = vmul.u32 %v1127, %v1118
    %v1173 = vadd.s32 %v1149, %v1168
    %vm1174 = vc.u32 %v1149, %v1168
    %v1175 = vadd.s32 %v1171, 1
    %v1176 = vsel %vm1174, %v1175, %v1171
    %v1177 = vadd.s32 %v1172, %v1176
    %v1178 = vadd.s32 %v1177, 536870912
    %v1179 = vshrl.u32 %v1178, 30
    %v1180 = vshll.u32 %v1179, 30
    %v1181 = vsub.s32 %v1177, %v1180
    %vm1182 = vcmp.lt.s32.totalorder %v1181, 0
    %v1183 = vsub.s32 0, %v1181
    %v1184 = vsel %vm1182, %v1183, %v1181
    %v1185 = vclz %v1184
    %v1186 = vsub.s32 %v1185, 2
    %vm1187 = vcmp.gt.s32.totalorder 0, %v1186
    %v1188 = vsel %vm1187, 0, %v1186
    %v1189 = vsub.s32 32, %v1188
    %v1190 = vshll.u32 %v1181, %v1188
    %v1191 = vshrl.u32 %v1173, %v1189
    %v1192 = vor.u32 %v1190, %v1191
    %v1193 = vsub.s32 4294967266, %v1188
    %v1194 = vadd.s32 %v1193, 127
    %v1195 = vshll.u32 %v1194, 23
    %v1196 = vor.u32 4788187, %v1195
    %v1197 = vand.u32 2147483647, %v1196
    %v1199 = vcvt.s32.f32 %v1192
    %v1200 = vmul.f32 %v1199, %v1197
    %v1201 = vxor.u32 %v1200, 2147483648
    %v1202 = vsel %vm1081, %v1201, %v1200
    %v1203 = vsub.s32 4, %v1179
    %v1204 = vsel %vm1081, %v1203, %v1179
    %v1205 = vsel %vm1080, %v147, %v1202
    %v1206 = vsel %vm1080, 0, %v1204
    %v1207 = vmul.f32 %v1205, %v1205
    %v1208 = vmul.f32 %v1207, -0.001358992
    %v1209 = vadd.f32 %v1208, 0.041655596
    %v1210 = vmul.f32 %v1207, %v1209
    %v1211 = vadd.f32 %v1210, -0.4999988
    %v1212 = vmul.f32 %v1207, %v1211
    %v1213 = vadd.f32 1.0, %v1212
    %v1214 = vmul.f32 %v1205, %v1205
    %v1215 = vmul.f32 %v1214, -0.00019511016
    %v1216 = vadd.f32 %v1215, 0.008332121
    %v1217 = vmul.f32 %v1214, %v1216
    %v1218 = vadd.f32 %v1217, -0.16666654
    %v1219 = vmul.f32 %v1214, %v1218
    %v1220 = vadd.f32 %v1219, 1.0
    %v1221 = vmul.f32 %v1220, %v1205
    %vm1222 = vweird.f32 %v147
    %v1223 = vadd.s32 %v1206, 3
    %v1224 = vand.u32 %v1223, 3
    %vm1225 = vcmp.lt.s32.totalorder %v1224, 2
    %vm1226 = vcmp.eq.s32.totalorder %v1224, 0
    %v1227 = vxor.u32 %v1221, 2147483648
    %v1228 = vsel %vm1226, %v1213, %v1227
    %vm1229 = vcmp.eq.s32.totalorder %v1224, 2
    %v1230 = vxor.u32 %v1213, 2147483648
    %v1231 = vsel %vm1229, %v1230, %v1221
    %v1232 = vsel %vm1225, %v1228, %v1231
    %v1233 = vsel %vm1222, nan, %v1232
    %v1234 = vand.u32 2147483647, %v148
    %vm1235 = vcmp.le.f32.partialorder %v1234, 0.7853982
    %vm1236 = vcmp.lt.s32.totalorder %v148, 0
    %v1237 = vand.u32 %v148, 2139095040
    %v1238 = vshrl.u32 %v1237, 23
    %v1239 = vsub.s32 %v1238, 127
    %v1240 = vand.u32 2147483647, %v148
    %v1241 = vand.u32 %v1240, 8388607
    %v1242 = vor.u32 %v1241, 8388608
    %v1243 = vsub.s32 0, %v1242
    %v1244 = vadd.s32 %v1239, 1
    %vm1245 = vcmp.gt.s32.totalorder %v1244, 0
    %v1246 = vsel %vm1245, %v1244, 0
    %v1247 = vshrl.u32 %v1246, 5
    %v1248 = vand.u32 %v1246, 31
    %v1249 = vsub.s32 32, %v1248
    %v1250 = vshrl.u32 683565275, %v1249
    %v1251 = vshll.u32 683565275, %v1248
    %v1252 = vshrl.u32 2475754826, %v1249
    %v1253 = vor.u32 %v1251, %v1252
    %v1254 = vshll.u32 2475754826, %v1248
    %v1255 = vshrl.u32 2131351028, %v1249
    %v1256 = vor.u32 %v1254, %v1255
    %v1257 = vshll.u32 2131351028, %v1248
    %v1258 = vshrl.u32 2102212464, %v1249
    %v1259 = vor.u32 %v1257, %v1258
    %v1260 = vshll.u32 2102212464, %v1248
    %v1261 = vshrl.u32 920167782, %v1249
    %v1262 = vor.u32 %v1260, %v1261
    %v1263 = vshll.u32 920167782, %v1248
    %v1264 = vshrl.u32 1326507024, %v1249
    %v1265 = vor.u32 %v1263, %v1264
    %vm1266 = vcmp.lt.s32.totalorder %v1247, 1
    %vm1267 = vcmp.lt.s32.totalorder %v1247, 2
    %vm1268 = vcmp.lt.s32.totalorder %v1247, 3
    %vm1269 = vcmp.lt.s32.totalorder %v1247, 4
    %v1270 = vsel %vm1266, %v1250, %v1253
    %v1271 = vsel %vm1269, %v1259, 2102212464
    %v1272 = vsel %vm1268, %v1256, %v1271
    %v1273 = vsel %vm1267, %v1270, %v1272
    %v1274 = vsel %vm1266, %v1253, %v1256
    %v1275 = vsel %vm1269, %v1262, 920167782
    %v1276 = vsel %vm1268, %v1259, %v1275
    %v1277 = vsel %vm1267, %v1274, %v1276
    %v1278 = vsel %vm1266, %v1256, %v1259
    %v1279 = vsel %vm1269, %v1265, 1326507024
    %v1280 = vsel %vm1268, %v1262, %v1279
    %v1281 = vsel %vm1267, %v1278, %v1280
    %v1282 = vshll.u32 %v1242, 8
    %v1283 = vand.u32 %v1282, 65535
    %v1284 = vshrl.u32 %v1282, 16
    %v1285 = vand.u32 %v1281, 65535
    %v1286 = vshrl.u32 %v1281, 16
    %v1287 = vmul.u32 %v1283, %v1285
    %v1288 = vmul.u32 %v1283, %v1286
    %v1289 = vmul.u32 %v1284, %v1285
    %v1290 = vmul.u32 %v1284, %v1286
    %v1291 = vshll.u32 %v1288, 16
    %v1292 = vshrl.u32 %v1288, 16
    %v1293 = vshll.u32 %v1289, 16
    %v1294 = vshrl.u32 %v1289, 16
    %vm1295 = vc.u32 %v1287, %v1291
    %v1296 = vsel %vm1295, 1, 0
    %v1297 = vadd.s32 %v1287, %v1291
    %v1298 = vadd.s32 %v1290, %v1296
    %vm1299 = vc.u32 %v1297, %v1293
    %v1300 = vsel %vm1299, 1, 0
    %v1301 = vadd.s32 %v1297, %v1293
    %v1302 = vadd.s32 %v1298, %v1300
    %v1303 = vadd.s32 %v1302, %v1292
    %v1304 = vadd.s32 %v1303, %v1294
    %v1305 = vand.u32 %v1282, 65535
    %v1306 = vshrl.u32 %v1282, 16
    %v1307 = vand.u32 %v1277, 65535
    %v1308 = vshrl.u32 %v1277, 16
    %v1309 = vmul.u32 %v1305, %v1307
    %v1310 = vmul.u32 %v1305, %v1308
    %v1311 = vmul.u32 %v1306, %v1307
    %v1312 = vmul.u32 %v1306, %v1308
    %v1313 = vshll.u32 %v1310, 16
    %v1314 = vshrl.u32 %v1310, 16
    %v1315 = vshll.u32 %v1311, 16
    %v1316 = vshrl.u32 %v1311, 16
    %vm1317 = vc.u32 %v1309, %v1313
    %v1318 = vsel %vm1317, 1, 0
    %v1319 = vadd.s32 %v1309, %v1313
    %v1320 = vadd.s32 %v1312, %v1318
    %vm1321 = vc.u32 %v1319, %v1315
    %v1322 = vsel %vm1321, 1, 0
    %v1323 = vadd.s32 %v1319, %v1315
    %v1324 = vadd.s32 %v1320, %v1322
    %v1325 = vadd.s32 %v1324, %v1314
    %v1326 = vadd.s32 %v1325, %v1316
    %v1327 = vmul.u32 %v1282, %v1273
    %v1328 = vadd.s32 %v1304, %v1323
    %vm1329 = vc.u32 %v1304, %v1323
    %v1330 = vadd.s32 %v1326, 1
    %v1331 = vsel %vm1329, %v1330, %v1326
    %v1332 = vadd.s32 %v1327, %v1331
    %v1333 = vadd.s32 %v1332, 536870912
    %v1334 = vshrl.u32 %v1333, 30
    %v1335 = vshll.u32 %v1334, 30
    %v1336 = vsub.s32 %v1332, %v1335
    %vm1337 = vcmp.lt.s32.totalorder %v1336, 0
    %v1338 = vsub.s32 0, %v1336
    %v1339 = vsel %vm1337, %v1338, %v1336
    %v1340 = vclz %v1339
    %v1341 = vsub.s32 %v1340, 2
    %vm1342 = vcmp.gt.s32.totalorder 0, %v1341
    %v1343 = vsel %vm1342, 0, %v1341
    %v1344 = vsub.s32 32, %v1343
    %v1345 = vshll.u32 %v1336, %v1343
    %v1346 = vshrl.u32 %v1328, %v1344
    %v1347 = vor.u32 %v1345, %v1346
    %v1348 = vsub.s32 4294967266, %v1343
    %v1349 = vadd.s32 %v1348, 127
    %v1350 = vshll.u32 %v1349, 23
    %v1351 = vor.u32 4788187, %v1350
    %v1352 = vand.u32 2147483647, %v1351
    %v1354 = vcvt.s32.f32 %v1347
    %v1355 = vmul.f32 %v1354, %v1352
    %v1356 = vxor.u32 %v1355, 2147483648
    %v1357 = vsel %vm1236, %v1356, %v1355
    %v1358 = vsub.s32 4, %v1334
    %v1359 = vsel %vm1236, %v1358, %v1334
    %v1360 = vsel %vm1235, %v148, %v1357
    %v1361 = vsel %vm1235, 0, %v1359
    %v1362 = vmul.f32 %v1360, %v1360
    %v1363 = vmul.f32 %v1362, -0.001358992
    %v1364 = vadd.f32 %v1363, 0.041655596
    %v1365 = vmul.f32 %v1362, %v1364
    %v1366 = vadd.f32 %v1365, -0.4999988
    %v1367 = vmul.f32 %v1362, %v1366
    %v1368 = vadd.f32 1.0, %v1367
    %v1369 = vmul.f32 %v1360, %v1360
    %v1370 = vmul.f32 %v1369, -0.00019511016
    %v1371 = vadd.f32 %v1370, 0.008332121
    %v1372 = vmul.f32 %v1369, %v1371
    %v1373 = vadd.f32 %v1372, -0.16666654
    %v1374 = vmul.f32 %v1369, %v1373
    %v1375 = vadd.f32 %v1374, 1.0
    %v1376 = vmul.f32 %v1375, %v1360
    %vm1377 = vweird.f32 %v148
    %v1378 = vadd.s32 %v1361, 3
    %v1379 = vand.u32 %v1378, 3
    %vm1380 = vcmp.lt.s32.totalorder %v1379, 2
    %vm1381 = vcmp.eq.s32.totalorder %v1379, 0
    %v1382 = vxor.u32 %v1376, 2147483648
    %v1383 = vsel %vm1381, %v1368, %v1382
    %vm1384 = vcmp.eq.s32.totalorder %v1379, 2
    %v1385 = vxor.u32 %v1368, 2147483648
    %v1386 = vsel %vm1384, %v1385, %v1376
    %v1387 = vsel %vm1380, %v1383, %v1386
    %v1388 = vsel %vm1377, nan, %v1387
    %v1389 = vand.u32 2147483647, %v141
    %vm1390 = vcmp.le.f32.partialorder %v1389, 0.7853982
    %vm1391 = vcmp.lt.s32.totalorder %v141, 0
    %v1392 = vand.u32 %v141, 2139095040
    %v1393 = vshrl.u32 %v1392, 23
    %v1394 = vsub.s32 %v1393, 127
    %v1395 = vand.u32 2147483647, %v141
    %v1396 = vand.u32 %v1395, 8388607
    %v1397 = vor.u32 %v1396, 8388608
    %v1398 = vsub.s32 0, %v1397
    %v1399 = vadd.s32 %v1394, 1
    %vm1400 = vcmp.gt.s32.totalorder %v1399, 0
    %v1401 = vsel %vm1400, %v1399, 0
    %v1402 = vshrl.u32 %v1401, 5
    %v1403 = vand.u32 %v1401, 31
    %v1404 = vsub.s32 32, %v1403
    %v1405 = vshrl.u32 683565275, %v1404
    %v1406 = vshll.u32 683565275, %v1403
    %v1407 = vshrl.u32 2475754826, %v1404
    %v1408 = vor.u32 %v1406, %v1407
    %v1409 = vshll.u32 2475754826, %v1403
    %v1410 = vshrl.u32 2131351028, %v1404
    %v1411 = vor.u32 %v1409, %v1410
    %v1412 = vshll.u32 2131351028, %v1403
    %v1413 = vshrl.u32 2102212464, %v1404
    %v1414 = vor.u32 %v1412, %v1413
    %v1415 = vshll.u32 2102212464, %v1403
    %v1416 = vshrl.u32 920167782, %v1404
    %v1417 = vor.u32 %v1415, %v1416
    %v1418 = vshll.u32 920167782, %v1403
    %v1419 = vshrl.u32 1326507024, %v1404
    %v1420 = vor.u32 %v1418, %v1419
    %vm1421 = vcmp.lt.s32.totalorder %v1402, 1
    %vm1422 = vcmp.lt.s32.totalorder %v1402, 2
    %vm1423 = vcmp.lt.s32.totalorder %v1402, 3
    %vm1424 = vcmp.lt.s32.totalorder %v1402, 4
    %v1425 = vsel %vm1421, %v1405, %v1408
    %v1426 = vsel %vm1424, %v1414, 2102212464
    %v1427 = vsel %vm1423, %v1411, %v1426
    %v1428 = vsel %vm1422, %v1425, %v1427
    %v1429 = vsel %vm1421, %v1408, %v1411
    %v1430 = vsel %vm1424, %v1417, 920167782
    %v1431 = vsel %vm1423, %v1414, %v1430
    %v1432 = vsel %vm1422, %v1429, %v1431
    %v1433 = vsel %vm1421, %v1411, %v1414
    %v1434 = vsel %vm1424, %v1420, 1326507024
    %v1435 = vsel %vm1423, %v1417, %v1434
    %v1436 = vsel %vm1422, %v1433, %v1435
    %v1437 = vshll.u32 %v1397, 8
    %v1438 = vand.u32 %v1437, 65535
    %v1439 = vshrl.u32 %v1437, 16
    %v1440 = vand.u32 %v1436, 65535
    %v1441 = vshrl.u32 %v1436, 16
    %v1442 = vmul.u32 %v1438, %v1440
    %v1443 = vmul.u32 %v1438, %v1441
    %v1444 = vmul.u32 %v1439, %v1440
    %v1445 = vmul.u32 %v1439, %v1441
    %v1446 = vshll.u32 %v1443, 16
    %v1447 = vshrl.u32 %v1443, 16
    %v1448 = vshll.u32 %v1444, 16
    %v1449 = vshrl.u32 %v1444, 16
    %vm1450 = vc.u32 %v1442, %v1446
    %v1451 = vsel %vm1450, 1, 0
    %v1452 = vadd.s32 %v1442, %v1446
    %v1453 = vadd.s32 %v1445, %v1451
    %vm1454 = vc.u32 %v1452, %v1448
    %v1455 = vsel %vm1454, 1, 0
    %v1456 = vadd.s32 %v1452, %v1448
    %v1457 = vadd.s32 %v1453, %v1455
    %v1458 = vadd.s32 %v1457, %v1447
    %v1459 = vadd.s32 %v1458, %v1449
    %v1460 = vand.u32 %v1437, 65535
    %v1461 = vshrl.u32 %v1437, 16
    %v1462 = vand.u32 %v1432, 65535
    %v1463 = vshrl.u32 %v1432, 16
    %v1464 = vmul.u32 %v1460, %v1462
    %v1465 = vmul.u32 %v1460, %v1463
    %v1466 = vmul.u32 %v1461, %v1462
    %v1467 = vmul.u32 %v1461, %v1463
    %v1468 = vshll.u32 %v1465, 16
    %v1469 = vshrl.u32 %v1465, 16
    %v1470 = vshll.u32 %v1466, 16
    %v1471 = vshrl.u32 %v1466, 16
    %vm1472 = vc.u32 %v1464, %v1468
    %v1473 = vsel %vm1472, 1, 0
    %v1474 = vadd.s32 %v1464, %v1468
    %v1475 = vadd.s32 %v1467, %v1473
    %vm1476 = vc.u32 %v1474, %v1470
    %v1477 = vsel %vm1476, 1, 0
    %v1478 = vadd.s32 %v1474, %v1470
    %v1479 = vadd.s32 %v1475, %v1477
    %v1480 = vadd.s32 %v1479, %v1469
    %v1481 = vadd.s32 %v1480, %v1471
    %v1482 = vmul.u32 %v1437, %v1428
    %v1483 = vadd.s32 %v1459, %v1478
    %vm1484 = vc.u32 %v1459, %v1478
    %v1485 = vadd.s32 %v1481, 1
    %v1486 = vsel %vm1484, %v1485, %v1481
    %v1487 = vadd.s32 %v1482, %v1486
    %v1488 = vadd.s32 %v1487, 536870912
    %v1489 = vshrl.u32 %v1488, 30
    %v1490 = vshll.u32 %v1489, 30
    %v1491 = vsub.s32 %v1487, %v1490
    %vm1492 = vcmp.lt.s32.totalorder %v1491, 0
    %v1493 = vsub.s32 0, %v1491
    %v1494 = vsel %vm1492, %v1493, %v1491
    %v1495 = vclz %v1494
    %v1496 = vsub.s32 %v1495, 2
    %vm1497 = vcmp.gt.s32.totalorder 0, %v1496
    %v1498 = vsel %vm1497, 0, %v1496
    %v1499 = vsub.s32 32, %v1498
    %v1500 = vshll.u32 %v1491, %v1498
    %v1501 = vshrl.u32 %v1483, %v1499
    %v1502 = vor.u32 %v1500, %v1501
    %v1503 = vsub.s32 4294967266, %v1498
    %v1504 = vadd.s32 %v1503, 127
    %v1505 = vshll.u32 %v1504, 23
    %v1506 = vor.u32 4788187, %v1505
    %v1507 = vand.u32 2147483647, %v1506
    %v1509 = vcvt.s32.f32 %v1502
    %v1510 = vmul.f32 %v1509, %v1507
    %v1511 = vxor.u32 %v1510, 2147483648
    %v1512 = vsel %vm1391, %v1511, %v1510
    %v1513 = vsub.s32 4, %v1489
    %v1514 = vsel %vm1391, %v1513, %v1489
    %v1515 = vsel %vm1390, %v141, %v1512
    %v1516 = vsel %vm1390, 0, %v1514
    %v1517 = vmul.f32 %v1515, %v1515
    %v1518 = vmul.f32 %v1517, -0.001358992
    %v1519 = vadd.f32 %v1518, 0.041655596
    %v1520 = vmul.f32 %v1517, %v1519
    %v1521 = vadd.f32 %v1520, -0.4999988
    %v1522 = vmul.f32 %v1517, %v1521
    %v1523 = vadd.f32 1.0, %v1522
    %v1524 = vmul.f32 %v1515, %v1515
    %v1525 = vmul.f32 %v1524, -0.00019511016
    %v1526 = vadd.f32 %v1525, 0.008332121
    %v1527 = vmul.f32 %v1524, %v1526
    %v1528 = vadd.f32 %v1527, -0.16666654
    %v1529 = vmul.f32 %v1524, %v1528
    %v1530 = vadd.f32 %v1529, 1.0
    %v1531 = vmul.f32 %v1530, %v1515
    %vm1532 = vweird.f32 %v141
    %v1533 = vand.u32 %v1516, 3
    %vm1534 = vcmp.lt.s32.totalorder %v1533, 2
    %vm1535 = vcmp.eq.s32.totalorder %v1533, 0
    %v1536 = vxor.u32 %v1531, 2147483648
    %v1537 = vsel %vm1535, %v1523, %v1536
    %vm1538 = vcmp.eq.s32.totalorder %v1533, 2
    %v1539 = vxor.u32 %v1523, 2147483648
    %v1540 = vsel %vm1538, %v1539, %v1531
    %v1541 = vsel %vm1534, %v1537, %v1540
    %v1542 = vsel %vm1532, nan, %v1541
    %v1543 = vand.u32 2147483647, %v142
    %vm1544 = vcmp.le.f32.partialorder %v1543, 0.7853982
    %vm1545 = vcmp.lt.s32.totalorder %v142, 0
    %v1546 = vand.u32 %v142, 2139095040
    %v1547 = vshrl.u32 %v1546, 23
    %v1548 = vsub.s32 %v1547, 127
    %v1549 = vand.u32 2147483647, %v142
    %v1550 = vand.u32 %v1549, 8388607
    %v1551 = vor.u32 %v1550, 8388608
    %v1552 = vsub.s32 0, %v1551
    %v1553 = vadd.s32 %v1548, 1
    %vm1554 = vcmp.gt.s32.totalorder %v1553, 0
    %v1555 = vsel %vm1554, %v1553, 0
    %v1556 = vshrl.u32 %v1555, 5
    %v1557 = vand.u32 %v1555, 31
    %v1558 = vsub.s32 32, %v1557
    %v1559 = vshrl.u32 683565275, %v1558
    %v1560 = vshll.u32 683565275, %v1557
    %v1561 = vshrl.u32 2475754826, %v1558
    %v1562 = vor.u32 %v1560, %v1561
    %v1563 = vshll.u32 2475754826, %v1557
    %v1564 = vshrl.u32 2131351028, %v1558
    %v1565 = vor.u32 %v1563, %v1564
    %v1566 = vshll.u32 2131351028, %v1557
    %v1567 = vshrl.u32 2102212464, %v1558
    %v1568 = vor.u32 %v1566, %v1567
    %v1569 = vshll.u32 2102212464, %v1557
    %v1570 = vshrl.u32 920167782, %v1558
    %v1571 = vor.u32 %v1569, %v1570
    %v1572 = vshll.u32 920167782, %v1557
    %v1573 = vshrl.u32 1326507024, %v1558
    %v1574 = vor.u32 %v1572, %v1573
    %vm1575 = vcmp.lt.s32.totalorder %v1556, 1
    %vm1576 = vcmp.lt.s32.totalorder %v1556, 2
    %vm1577 = vcmp.lt.s32.totalorder %v1556, 3
    %vm1578 = vcmp.lt.s32.totalorder %v1556, 4
    %v1579 = vsel %vm1575, %v1559, %v1562
    %v1580 = vsel %vm1578, %v1568, 2102212464
    %v1581 = vsel %vm1577, %v1565, %v1580
    %v1582 = vsel %vm1576, %v1579, %v1581
    %v1583 = vsel %vm1575, %v1562, %v1565
    %v1584 = vsel %vm1578, %v1571, 920167782
    %v1585 = vsel %vm1577, %v1568, %v1584
    %v1586 = vsel %vm1576, %v1583, %v1585
    %v1587 = vsel %vm1575, %v1565, %v1568
    %v1588 = vsel %vm1578, %v1574, 1326507024
    %v1589 = vsel %vm1577, %v1571, %v1588
    %v1590 = vsel %vm1576, %v1587, %v1589
    %v1591 = vshll.u32 %v1551, 8
    %v1592 = vand.u32 %v1591, 65535
    %v1593 = vshrl.u32 %v1591, 16
    %v1594 = vand.u32 %v1590, 65535
    %v1595 = vshrl.u32 %v1590, 16
    %v1596 = vmul.u32 %v1592, %v1594
    %v1597 = vmul.u32 %v1592, %v1595
    %v1598 = vmul.u32 %v1593, %v1594
    %v1599 = vmul.u32 %v1593, %v1595
    %v1600 = vshll.u32 %v1597, 16
    %v1601 = vshrl.u32 %v1597, 16
    %v1602 = vshll.u32 %v1598, 16
    %v1603 = vshrl.u32 %v1598, 16
    %vm1604 = vc.u32 %v1596, %v1600
    %v1605 = vsel %vm1604, 1, 0
    %v1606 = vadd.s32 %v1596, %v1600
    %v1607 = vadd.s32 %v1599, %v1605
    %vm1608 = vc.u32 %v1606, %v1602
    %v1609 = vsel %vm1608, 1, 0
    %v1610 = vadd.s32 %v1606, %v1602
    %v1611 = vadd.s32 %v1607, %v1609
    %v1612 = vadd.s32 %v1611, %v1601
    %v1613 = vadd.s32 %v1612, %v1603
    %v1614 = vand.u32 %v1591, 65535
    %v1615 = vshrl.u32 %v1591, 16
    %v1616 = vand.u32 %v1586, 65535
    %v1617 = vshrl.u32 %v1586, 16
    %v1618 = vmul.u32 %v1614, %v1616
    %v1619 = vmul.u32 %v1614, %v1617
    %v1620 = vmul.u32 %v1615, %v1616
    %v1621 = vmul.u32 %v1615, %v1617
    %v1622 = vshll.u32 %v1619, 16
    %v1623 = vshrl.u32 %v1619, 16
    %v1624 = vshll.u32 %v1620, 16
    %v1625 = vshrl.u32 %v1620, 16
    %vm1626 = vc.u32 %v1618, %v1622
    %v1627 = vsel %vm1626, 1, 0
    %v1628 = vadd.s32 %v1618, %v1622
    %v1629 = vadd.s32 %v1621, %v1627
    %vm1630 = vc.u32 %v1628, %v1624
    %v1631 = vsel %vm1630, 1, 0
    %v1632 = vadd.s32 %v1628, %v1624
    %v1633 = vadd.s32 %v1629, %v1631
    %v1634 = vadd.s32 %v1633, %v1623
    %v1635 = vadd.s32 %v1634, %v1625
    %v1636 = vmul.u32 %v1591, %v1582
    %v1637 = vadd.s32 %v1613, %v1632
    %vm1638 = vc.u32 %v1613, %v1632
    %v1639 = vadd.s32 %v1635, 1
    %v1640 = vsel %vm1638, %v1639, %v1635
    %v1641 = vadd.s32 %v1636, %v1640
    %v1642 = vadd.s32 %v1641, 536870912
    %v1643 = vshrl.u32 %v1642, 30
    %v1644 = vshll.u32 %v1643, 30
    %v1645 = vsub.s32 %v1641, %v1644
    %vm1646 = vcmp.lt.s32.totalorder %v1645, 0
    %v1647 = vsub.s32 0, %v1645
    %v1648 = vsel %vm1646, %v1647, %v1645
    %v1649 = vclz %v1648
    %v1650 = vsub.s32 %v1649, 2
    %vm1651 = vcmp.gt.s32.totalorder 0, %v1650
    %v1652 = vsel %vm1651, 0, %v1650
    %v1653 = vsub.s32 32, %v1652
    %v1654 = vshll.u32 %v1645, %v1652
    %v1655 = vshrl.u32 %v1637, %v1653
    %v1656 = vor.u32 %v1654, %v1655
    %v1657 = vsub.s32 4294967266, %v1652
    %v1658 = vadd.s32 %v1657, 127
    %v1659 = vshll.u32 %v1658, 23
    %v1660 = vor.u32 4788187, %v1659
    %v1661 = vand.u32 2147483647, %v1660
    %v1663 = vcvt.s32.f32 %v1656
    %v1664 = vmul.f32 %v1663, %v1661
    %v1665 = vxor.u32 %v1664, 2147483648
    %v1666 = vsel %vm1545, %v1665, %v1664
    %v1667 = vsub.s32 4, %v1643
    %v1668 = vsel %vm1545, %v1667, %v1643
    %v1669 = vsel %vm1544, %v142, %v1666
    %v1670 = vsel %vm1544, 0, %v1668
    %v1671 = vmul.f32 %v1669, %v1669
    %v1672 = vmul.f32 %v1671, -0.001358992
    %v1673 = vadd.f32 %v1672, 0.041655596
    %v1674 = vmul.f32 %v1671, %v1673
    %v1675 = vadd.f32 %v1674, -0.4999988
    %v1676 = vmul.f32 %v1671, %v1675
    %v1677 = vadd.f32 1.0, %v1676
    %v1678 = vmul.f32 %v1669, %v1669
    %v1679 = vmul.f32 %v1678, -0.00019511016
    %v1680 = vadd.f32 %v1679, 0.008332121
    %v1681 = vmul.f32 %v1678, %v1680
    %v1682 = vadd.f32 %v1681, -0.16666654
    %v1683 = vmul.f32 %v1678, %v1682
    %v1684 = vadd.f32 %v1683, 1.0
    %v1685 = vmul.f32 %v1684, %v1669
    %vm1686 = vweird.f32 %v142
    %v1687 = vand.u32 %v1670, 3
    %vm1688 = vcmp.lt.s32.totalorder %v1687, 2
    %vm1689 = vcmp.eq.s32.totalorder %v1687, 0
    %v1690 = vxor.u32 %v1685, 2147483648
    %v1691 = vsel %vm1689, %v1677, %v1690
    %vm1692 = vcmp.eq.s32.totalorder %v1687, 2
    %v1693 = vxor.u32 %v1677, 2147483648
    %v1694 = vsel %vm1692, %v1693, %v1685
    %v1695 = vsel %vm1688, %v1691, %v1694
    %v1696 = vsel %vm1686, nan, %v1695
    %v1697 = vand.u32 2147483647, %v143
    %vm1698 = vcmp.le.f32.partialorder %v1697, 0.7853982
    %vm1699 = vcmp.lt.s32.totalorder %v143, 0
    %v1700 = vand.u32 %v143, 2139095040
    %v1701 = vshrl.u32 %v1700, 23
    %v1702 = vsub.s32 %v1701, 127
    %v1703 = vand.u32 2147483647, %v143
    %v1704 = vand.u32 %v1703, 8388607
    %v1705 = vor.u32 %v1704, 8388608
    %v1706 = vsub.s32 0, %v1705
    %v1707 = vadd.s32 %v1702, 1
    %vm1708 = vcmp.gt.s32.totalorder %v1707, 0
    %v1709 = vsel %vm1708, %v1707, 0
    %v1710 = vshrl.u32 %v1709, 5
    %v1711 = vand.u32 %v1709, 31
    %v1712 = vsub.s32 32, %v1711
    %v1713 = vshrl.u32 683565275, %v1712
    %v1714 = vshll.u32 683565275, %v1711
    %v1715 = vshrl.u32 2475754826, %v1712
    %v1716 = vor.u32 %v1714, %v1715
    %v1717 = vshll.u32 2475754826, %v1711
    %v1718 = vshrl.u32 2131351028, %v1712
    %v1719 = vor.u32 %v1717, %v1718
    %v1720 = vshll.u32 2131351028, %v1711
    %v1721 = vshrl.u32 2102212464, %v1712
    %v1722 = vor.u32 %v1720, %v1721
    %v1723 = vshll.u32 2102212464, %v1711
    %v1724 = vshrl.u32 920167782, %v1712
    %v1725 = vor.u32 %v1723, %v1724
    %v1726 = vshll.u32 920167782, %v1711
    %v1727 = vshrl.u32 1326507024, %v1712
    %v1728 = vor.u32 %v1726, %v1727
    %vm1729 = vcmp.lt.s32.totalorder %v1710, 1
    %vm1730 = vcmp.lt.s32.totalorder %v1710, 2
    %vm1731 = vcmp.lt.s32.totalorder %v1710, 3
    %vm1732 = vcmp.lt.s32.totalorder %v1710, 4
    %v1733 = vsel %vm1729, %v1713, %v1716
    %v1734 = vsel %vm1732, %v1722, 2102212464
    %v1735 = vsel %vm1731, %v1719, %v1734
    %v1736 = vsel %vm1730, %v1733, %v1735
    %v1737 = vsel %vm1729, %v1716, %v1719
    %v1738 = vsel %vm1732, %v1725, 920167782
    %v1739 = vsel %vm1731, %v1722, %v1738
    %v1740 = vsel %vm1730, %v1737, %v1739
    %v1741 = vsel %vm1729, %v1719, %v1722
    %v1742 = vsel %vm1732, %v1728, 1326507024
    %v1743 = vsel %vm1731, %v1725, %v1742
    %v1744 = vsel %vm1730, %v1741, %v1743
    %v1745 = vshll.u32 %v1705, 8
    %v1746 = vand.u32 %v1745, 65535
    %v1747 = vshrl.u32 %v1745, 16
    %v1748 = vand.u32 %v1744, 65535
    %v1749 = vshrl.u32 %v1744, 16
    %v1750 = vmul.u32 %v1746, %v1748
    %v1751 = vmul.u32 %v1746, %v1749
    %v1752 = vmul.u32 %v1747, %v1748
    %v1753 = vmul.u32 %v1747, %v1749
    %v1754 = vshll.u32 %v1751, 16
    %v1755 = vshrl.u32 %v1751, 16
    %v1756 = vshll.u32 %v1752, 16
    %v1757 = vshrl.u32 %v1752, 16
    %vm1758 = vc.u32 %v1750, %v1754
    %v1759 = vsel %vm1758, 1, 0
    %v1760 = vadd.s32 %v1750, %v1754
    %v1761 = vadd.s32 %v1753, %v1759
    %vm1762 = vc.u32 %v1760, %v1756
    %v1763 = vsel %vm1762, 1, 0
    %v1764 = vadd.s32 %v1760, %v1756
    %v1765 = vadd.s32 %v1761, %v1763
    %v1766 = vadd.s32 %v1765, %v1755
    %v1767 = vadd.s32 %v1766, %v1757
    %v1768 = vand.u32 %v1745, 65535
    %v1769 = vshrl.u32 %v1745, 16
    %v1770 = vand.u32 %v1740, 65535
    %v1771 = vshrl.u32 %v1740, 16
    %v1772 = vmul.u32 %v1768, %v1770
    %v1773 = vmul.u32 %v1768, %v1771
    %v1774 = vmul.u32 %v1769, %v1770
    %v1775 = vmul.u32 %v1769, %v1771
    %v1776 = vshll.u32 %v1773, 16
    %v1777 = vshrl.u32 %v1773, 16
    %v1778 = vshll.u32 %v1774, 16
    %v1779 = vshrl.u32 %v1774, 16
    %vm1780 = vc.u32 %v1772, %v1776
    %v1781 = vsel %vm1780, 1, 0
    %v1782 = vadd.s32 %v1772, %v1776
    %v1783 = vadd.s32 %v1775, %v1781
    %vm1784 = vc.u32 %v1782, %v1778
    %v1785 = vsel %vm1784, 1, 0
    %v1786 = vadd.s32 %v1782, %v1778
    %v1787 = vadd.s32 %v1783, %v1785
    %v1788 = vadd.s32 %v1787, %v1777
    %v1789 = vadd.s32 %v1788, %v1779
    %v1790 = vmul.u32 %v1745, %v1736
    %v1791 = vadd.s32 %v1767, %v1786
    %vm1792 = vc.u32 %v1767, %v1786
    %v1793 = vadd.s32 %v1789, 1
    %v1794 = vsel %vm1792, %v1793, %v1789
    %v1795 = vadd.s32 %v1790, %v1794
    %v1796 = vadd.s32 %v1795, 536870912
    %v1797 = vshrl.u32 %v1796, 30
    %v1798 = vshll.u32 %v1797, 30
    %v1799 = vsub.s32 %v1795, %v1798
    %vm1800 = vcmp.lt.s32.totalorder %v1799, 0
    %v1801 = vsub.s32 0, %v1799
    %v1802 = vsel %vm1800, %v1801, %v1799
    %v1803 = vclz %v1802
    %v1804 = vsub.s32 %v1803, 2
    %vm1805 = vcmp.gt.s32.totalorder 0, %v1804
    %v1806 = vsel %vm1805, 0, %v1804
    %v1807 = vsub.s32 32, %v1806
    %v1808 = vshll.u32 %v1799, %v1806
    %v1809 = vshrl.u32 %v1791, %v1807
    %v1810 = vor.u32 %v1808, %v1809
    %v1811 = vsub.s32 4294967266, %v1806
    %v1812 = vadd.s32 %v1811, 127
    %v1813 = vshll.u32 %v1812, 23
    %v1814 = vor.u32 4788187, %v1813
    %v1815 = vand.u32 2147483647, %v1814
    %v1817 = vcvt.s32.f32 %v1810
    %v1818 = vmul.f32 %v1817, %v1815
    %v1819 = vxor.u32 %v1818, 2147483648
    %v1820 = vsel %vm1699, %v1819, %v1818
    %v1821 = vsub.s32 4, %v1797
    %v1822 = vsel %vm1699, %v1821, %v1797
    %v1823 = vsel %vm1698, %v143, %v1820
    %v1824 = vsel %vm1698, 0, %v1822
    %v1825 = vmul.f32 %v1823, %v1823
    %v1826 = vmul.f32 %v1825, -0.001358992
    %v1827 = vadd.f32 %v1826, 0.041655596
    %v1828 = vmul.f32 %v1825, %v1827
    %v1829 = vadd.f32 %v1828, -0.4999988
    %v1830 = vmul.f32 %v1825, %v1829
    %v1831 = vadd.f32 1.0, %v1830
    %v1832 = vmul.f32 %v1823, %v1823
    %v1833 = vmul.f32 %v1832, -0.00019511016
    %v1834 = vadd.f32 %v1833, 0.008332121
    %v1835 = vmul.f32 %v1832, %v1834
    %v1836 = vadd.f32 %v1835, -0.16666654
    %v1837 = vmul.f32 %v1832, %v1836
    %v1838 = vadd.f32 %v1837, 1.0
    %v1839 = vmul.f32 %v1838, %v1823
    %vm1840 = vweird.f32 %v143
    %v1841 = vand.u32 %v1824, 3
    %vm1842 = vcmp.lt.s32.totalorder %v1841, 2
    %vm1843 = vcmp.eq.s32.totalorder %v1841, 0
    %v1844 = vxor.u32 %v1839, 2147483648
    %v1845 = vsel %vm1843, %v1831, %v1844
    %vm1846 = vcmp.eq.s32.totalorder %v1841, 2
    %v1847 = vxor.u32 %v1831, 2147483648
    %v1848 = vsel %vm1846, %v1847, %v1839
    %v1849 = vsel %vm1842, %v1845, %v1848
    %v1850 = vsel %vm1840, nan, %v1849
    %v1851 = vand.u32 2147483647, %v144
    %vm1852 = vcmp.le.f32.partialorder %v1851, 0.7853982
    %vm1853 = vcmp.lt.s32.totalorder %v144, 0
    %v1854 = vand.u32 %v144, 2139095040
    %v1855 = vshrl.u32 %v1854, 23
    %v1856 = vsub.s32 %v1855, 127
    %v1857 = vand.u32 2147483647, %v144
    %v1858 = vand.u32 %v1857, 8388607
    %v1859 = vor.u32 %v1858, 8388608
    %v1860 = vsub.s32 0, %v1859
    %v1861 = vadd.s32 %v1856, 1
    %vm1862 = vcmp.gt.s32.totalorder %v1861, 0
    %v1863 = vsel %vm1862, %v1861, 0
    %v1864 = vshrl.u32 %v1863, 5
    %v1865 = vand.u32 %v1863, 31
    %v1866 = vsub.s32 32, %v1865
    %v1867 = vshrl.u32 683565275, %v1866
    %v1868 = vshll.u32 683565275, %v1865
    %v1869 = vshrl.u32 2475754826, %v1866
    %v1870 = vor.u32 %v1868, %v1869
    %v1871 = vshll.u32 2475754826, %v1865
    %v1872 = vshrl.u32 2131351028, %v1866
    %v1873 = vor.u32 %v1871, %v1872
    %v1874 = vshll.u32 2131351028, %v1865
    %v1875 = vshrl.u32 2102212464, %v1866
    %v1876 = vor.u32 %v1874, %v1875
    %v1877 = vshll.u32 2102212464, %v1865
    %v1878 = vshrl.u32 920167782, %v1866
    %v1879 = vor.u32 %v1877, %v1878
    %v1880 = vshll.u32 920167782, %v1865
    %v1881 = vshrl.u32 1326507024, %v1866
    %v1882 = vor.u32 %v1880, %v1881
    %vm1883 = vcmp.lt.s32.totalorder %v1864, 1
    %vm1884 = vcmp.lt.s32.totalorder %v1864, 2
    %vm1885 = vcmp.lt.s32.totalorder %v1864, 3
    %vm1886 = vcmp.lt.s32.totalorder %v1864, 4
    %v1887 = vsel %vm1883, %v1867, %v1870
    %v1888 = vsel %vm1886, %v1876, 2102212464
    %v1889 = vsel %vm1885, %v1873, %v1888
    %v1890 = vsel %vm1884, %v1887, %v1889
    %v1891 = vsel %vm1883, %v1870, %v1873
    %v1892 = vsel %vm1886, %v1879, 920167782
    %v1893 = vsel %vm1885, %v1876, %v1892
    %v1894 = vsel %vm1884, %v1891, %v1893
    %v1895 = vsel %vm1883, %v1873, %v1876
    %v1896 = vsel %vm1886, %v1882, 1326507024
    %v1897 = vsel %vm1885, %v1879, %v1896
    %v1898 = vsel %vm1884, %v1895, %v1897
    %v1899 = vshll.u32 %v1859, 8
    %v1900 = vand.u32 %v1899, 65535
    %v1901 = vshrl.u32 %v1899, 16
    %v1902 = vand.u32 %v1898, 65535
    %v1903 = vshrl.u32 %v1898, 16
    %v1904 = vmul.u32 %v1900, %v1902
    %v1905 = vmul.u32 %v1900, %v1903
    %v1906 = vmul.u32 %v1901, %v1902
    %v1907 = vmul.u32 %v1901, %v1903
    %v1908 = vshll.u32 %v1905, 16
    %v1909 = vshrl.u32 %v1905, 16
    %v1910 = vshll.u32 %v1906, 16
    %v1911 = vshrl.u32 %v1906, 16
    %vm1912 = vc.u32 %v1904, %v1908
    %v1913 = vsel %vm1912, 1, 0
    %v1914 = vadd.s32 %v1904, %v1908
    %v1915 = vadd.s32 %v1907, %v1913
    %vm1916 = vc.u32 %v1914, %v1910
    %v1917 = vsel %vm1916, 1, 0
    %v1918 = vadd.s32 %v1914, %v1910
    %v1919 = vadd.s32 %v1915, %v1917
    %v1920 = vadd.s32 %v1919, %v1909
    %v1921 = vadd.s32 %v1920, %v1911
    %v1922 = vand.u32 %v1899, 65535
    %v1923 = vshrl.u32 %v1899, 16
    %v1924 = vand.u32 %v1894, 65535
    %v1925 = vshrl.u32 %v1894, 16
    %v1926 = vmul.u32 %v1922, %v1924
    %v1927 = vmul.u32 %v1922, %v1925
    %v1928 = vmul.u32 %v1923, %v1924
    %v1929 = vmul.u32 %v1923, %v1925
    %v1930 = vshll.u32 %v1927, 16
    %v1931 = vshrl.u32 %v1927, 16
    %v1932 = vshll.u32 %v1928, 16
    %v1933 = vshrl.u32 %v1928, 16
    %vm1934 = vc.u32 %v1926, %v1930
    %v1935 = vsel %vm1934, 1, 0
    %v1936 = vadd.s32 %v1926, %v1930
    %v1937 = vadd.s32 %v1929, %v1935
    %vm1938 = vc.u32 %v1936, %v1932
    %v1939 = vsel %vm1938, 1, 0
    %v1940 = vadd.s32 %v1936, %v1932
    %v1941 = vadd.s32 %v1937, %v1939
    %v1942 = vadd.s32 %v1941, %v1931
    %v1943 = vadd.s32 %v1942, %v1933
    %v1944 = vmul.u32 %v1899, %v1890
    %v1945 = vadd.s32 %v1921, %v1940
    %vm1946 = vc.u32 %v1921, %v1940
    %v1947 = vadd.s32 %v1943, 1
    %v1948 = vsel %vm1946, %v1947, %v1943
    %v1949 = vadd.s32 %v1944, %v1948
    %v1950 = vadd.s32 %v1949, 536870912
    %v1951 = vshrl.u32 %v1950, 30
    %v1952 = vshll.u32 %v1951, 30
    %v1953 = vsub.s32 %v1949, %v1952
    %vm1954 = vcmp.lt.s32.totalorder %v1953, 0
    %v1955 = vsub.s32 0, %v1953
    %v1956 = vsel %vm1954, %v1955, %v1953
    %v1957 = vclz %v1956
    %v1958 = vsub.s32 %v1957, 2
    %vm1959 = vcmp.gt.s32.totalorder 0, %v1958
    %v1960 = vsel %vm1959, 0, %v1958
    %v1961 = vsub.s32 32, %v1960
    %v1962 = vshll.u32 %v1953, %v1960
    %v1963 = vshrl.u32 %v1945, %v1961
    %v1964 = vor.u32 %v1962, %v1963
    %v1965 = vsub.s32 4294967266, %v1960
    %v1966 = vadd.s32 %v1965, 127
    %v1967 = vshll.u32 %v1966, 23
    %v1968 = vor.u32 4788187, %v1967
    %v1969 = vand.u32 2147483647, %v1968
    %v1971 = vcvt.s32.f32 %v1964
    %v1972 = vmul.f32 %v1971, %v1969
    %v1973 = vxor.u32 %v1972, 2147483648
    %v1974 = vsel %vm1853, %v1973, %v1972
    %v1975 = vsub.s32 4, %v1951
    %v1976 = vsel %vm1853, %v1975, %v1951
    %v1977 = vsel %vm1852, %v144, %v1974
    %v1978 = vsel %vm1852, 0, %v1976
    %v1979 = vmul.f32 %v1977, %v1977
    %v1980 = vmul.f32 %v1979, -0.001358992
    %v1981 = vadd.f32 %v1980, 0.041655596
    %v1982 = vmul.f32 %v1979, %v1981
    %v1983 = vadd.f32 %v1982, -0.4999988
    %v1984 = vmul.f32 %v1979, %v1983
    %v1985 = vadd.f32 1.0, %v1984
    %v1986 = vmul.f32 %v1977, %v1977
    %v1987 = vmul.f32 %v1986, -0.00019511016
    %v1988 = vadd.f32 %v1987, 0.008332121
    %v1989 = vmul.f32 %v1986, %v1988
    %v1990 = vadd.f32 %v1989, -0.16666654
    %v1991 = vmul.f32 %v1986, %v1990
    %v1992 = vadd.f32 %v1991, 1.0
    %v1993 = vmul.f32 %v1992, %v1977
    %vm1994 = vweird.f32 %v144
    %v1995 = vand.u32 %v1978, 3
    %vm1996 = vcmp.lt.s32.totalorder %v1995, 2
    %vm1997 = vcmp.eq.s32.totalorder %v1995, 0
    %v1998 = vxor.u32 %v1993, 2147483648
    %v1999 = vsel %vm1997, %v1985, %v1998
    %vm2000 = vcmp.eq.s32.totalorder %v1995, 2
    %v2001 = vxor.u32 %v1985, 2147483648
    %v2002 = vsel %vm2000, %v2001, %v1993
    %v2003 = vsel %vm1996, %v1999, %v2002
    %v2004 = vsel %vm1994, nan, %v2003
    %v2005 = vand.u32 2147483647, %v145
    %vm2006 = vcmp.le.f32.partialorder %v2005, 0.7853982
    %vm2007 = vcmp.lt.s32.totalorder %v145, 0
    %v2008 = vand.u32 %v145, 2139095040
    %v2009 = vshrl.u32 %v2008, 23
    %v2010 = vsub.s32 %v2009, 127
    %v2011 = vand.u32 2147483647, %v145
    %v2012 = vand.u32 %v2011, 8388607
    %v2013 = vor.u32 %v2012, 8388608
    %v2014 = vsub.s32 0, %v2013
    %v2015 = vadd.s32 %v2010, 1
    %vm2016 = vcmp.gt.s32.totalorder %v2015, 0
    %v2017 = vsel %vm2016, %v2015, 0
    %v2018 = vshrl.u32 %v2017, 5
    %v2019 = vand.u32 %v2017, 31
    %v2020 = vsub.s32 32, %v2019
    %v2021 = vshrl.u32 683565275, %v2020
    %v2022 = vshll.u32 683565275, %v2019
    %v2023 = vshrl.u32 2475754826, %v2020
    %v2024 = vor.u32 %v2022, %v2023
    %v2025 = vshll.u32 2475754826, %v2019
    %v2026 = vshrl.u32 2131351028, %v2020
    %v2027 = vor.u32 %v2025, %v2026
    %v2028 = vshll.u32 2131351028, %v2019
    %v2029 = vshrl.u32 2102212464, %v2020
    %v2030 = vor.u32 %v2028, %v2029
    %v2031 = vshll.u32 2102212464, %v2019
    %v2032 = vshrl.u32 920167782, %v2020
    %v2033 = vor.u32 %v2031, %v2032
    %v2034 = vshll.u32 920167782, %v2019
    %v2035 = vshrl.u32 1326507024, %v2020
    %v2036 = vor.u32 %v2034, %v2035
    %vm2037 = vcmp.lt.s32.totalorder %v2018, 1
    %vm2038 = vcmp.lt.s32.totalorder %v2018, 2
    %vm2039 = vcmp.lt.s32.totalorder %v2018, 3
    %vm2040 = vcmp.lt.s32.totalorder %v2018, 4
    %v2041 = vsel %vm2037, %v2021, %v2024
    %v2042 = vsel %vm2040, %v2030, 2102212464
    %v2043 = vsel %vm2039, %v2027, %v2042
    %v2044 = vsel %vm2038, %v2041, %v2043
    %v2045 = vsel %vm2037, %v2024, %v2027
    %v2046 = vsel %vm2040, %v2033, 920167782
    %v2047 = vsel %vm2039, %v2030, %v2046
    %v2048 = vsel %vm2038, %v2045, %v2047
    %v2049 = vsel %vm2037, %v2027, %v2030
    %v2050 = vsel %vm2040, %v2036, 1326507024
    %v2051 = vsel %vm2039, %v2033, %v2050
    %v2052 = vsel %vm2038, %v2049, %v2051
    %v2053 = vshll.u32 %v2013, 8
    %v2054 = vand.u32 %v2053, 65535
    %v2055 = vshrl.u32 %v2053, 16
    %v2056 = vand.u32 %v2052, 65535
    %v2057 = vshrl.u32 %v2052, 16
    %v2058 = vmul.u32 %v2054, %v2056
    %v2059 = vmul.u32 %v2054, %v2057
    %v2060 = vmul.u32 %v2055, %v2056
    %v2061 = vmul.u32 %v2055, %v2057
    %v2062 = vshll.u32 %v2059, 16
    %v2063 = vshrl.u32 %v2059, 16
    %v2064 = vshll.u32 %v2060, 16
    %v2065 = vshrl.u32 %v2060, 16
    %vm2066 = vc.u32 %v2058, %v2062
    %v2067 = vsel %vm2066, 1, 0
    %v2068 = vadd.s32 %v2058, %v2062
    %v2069 = vadd.s32 %v2061, %v2067
    %vm2070 = vc.u32 %v2068, %v2064
    %v2071 = vsel %vm2070, 1, 0
    %v2072 = vadd.s32 %v2068, %v2064
    %v2073 = vadd.s32 %v2069, %v2071
    %v2074 = vadd.s32 %v2073, %v2063
    %v2075 = vadd.s32 %v2074, %v2065
    %v2076 = vand.u32 %v2053, 65535
    %v2077 = vshrl.u32 %v2053, 16
    %v2078 = vand.u32 %v2048, 65535
    %v2079 = vshrl.u32 %v2048, 16
    %v2080 = vmul.u32 %v2076, %v2078
    %v2081 = vmul.u32 %v2076, %v2079
    %v2082 = vmul.u32 %v2077, %v2078
    %v2083 = vmul.u32 %v2077, %v2079
    %v2084 = vshll.u32 %v2081, 16
    %v2085 = vshrl.u32 %v2081, 16
    %v2086 = vshll.u32 %v2082, 16
    %v2087 = vshrl.u32 %v2082, 16
    %vm2088 = vc.u32 %v2080, %v2084
    %v2089 = vsel %vm2088, 1, 0
    %v2090 = vadd.s32 %v2080, %v2084
    %v2091 = vadd.s32 %v2083, %v2089
    %vm2092 = vc.u32 %v2090, %v2086
    %v2093 = vsel %vm2092, 1, 0
    %v2094 = vadd.s32 %v2090, %v2086
    %v2095 = vadd.s32 %v2091, %v2093
    %v2096 = vadd.s32 %v2095, %v2085
    %v2097 = vadd.s32 %v2096, %v2087
    %v2098 = vmul.u32 %v2053, %v2044
    %v2099 = vadd.s32 %v2075, %v2094
    %vm2100 = vc.u32 %v2075, %v2094
    %v2101 = vadd.s32 %v2097, 1
    %v2102 = vsel %vm2100, %v2101, %v2097
    %v2103 = vadd.s32 %v2098, %v2102
    %v2104 = vadd.s32 %v2103, 536870912
    %v2105 = vshrl.u32 %v2104, 30
    %v2106 = vshll.u32 %v2105, 30
    %v2107 = vsub.s32 %v2103, %v2106
    %vm2108 = vcmp.lt.s32.totalorder %v2107, 0
    %v2109 = vsub.s32 0, %v2107
    %v2110 = vsel %vm2108, %v2109, %v2107
    %v2111 = vclz %v2110
    %v2112 = vsub.s32 %v2111, 2
    %vm2113 = vcmp.gt.s32.totalorder 0, %v2112
    %v2114 = vsel %vm2113, 0, %v2112
    %v2115 = vsub.s32 32, %v2114
    %v2116 = vshll.u32 %v2107, %v2114
    %v2117 = vshrl.u32 %v2099, %v2115
    %v2118 = vor.u32 %v2116, %v2117
    %v2119 = vsub.s32 4294967266, %v2114
    %v2120 = vadd.s32 %v2119, 127
    %v2121 = vshll.u32 %v2120, 23
    %v2122 = vor.u32 4788187, %v2121
    %v2123 = vand.u32 2147483647, %v2122
    %v2125 = vcvt.s32.f32 %v2118
    %v2126 = vmul.f32 %v2125, %v2123
    %v2127 = vxor.u32 %v2126, 2147483648
    %v2128 = vsel %vm2007, %v2127, %v2126
    %v2129 = vsub.s32 4, %v2105
    %v2130 = vsel %vm2007, %v2129, %v2105
    %v2131 = vsel %vm2006, %v145, %v2128
    %v2132 = vsel %vm2006, 0, %v2130
    %v2133 = vmul.f32 %v2131, %v2131
    %v2134 = vmul.f32 %v2133, -0.001358992
    %v2135 = vadd.f32 %v2134, 0.041655596
    %v2136 = vmul.f32 %v2133, %v2135
    %v2137 = vadd.f32 %v2136, -0.4999988
    %v2138 = vmul.f32 %v2133, %v2137
    %v2139 = vadd.f32 1.0, %v2138
    %v2140 = vmul.f32 %v2131, %v2131
    %v2141 = vmul.f32 %v2140, -0.00019511016
    %v2142 = vadd.f32 %v2141, 0.008332121
    %v2143 = vmul.f32 %v2140, %v2142
    %v2144 = vadd.f32 %v2143, -0.16666654
    %v2145 = vmul.f32 %v2140, %v2144
    %v2146 = vadd.f32 %v2145, 1.0
    %v2147 = vmul.f32 %v2146, %v2131
    %vm2148 = vweird.f32 %v145
    %v2149 = vand.u32 %v2132, 3
    %vm2150 = vcmp.lt.s32.totalorder %v2149, 2
    %vm2151 = vcmp.eq.s32.totalorder %v2149, 0
    %v2152 = vxor.u32 %v2147, 2147483648
    %v2153 = vsel %vm2151, %v2139, %v2152
    %vm2154 = vcmp.eq.s32.totalorder %v2149, 2
    %v2155 = vxor.u32 %v2139, 2147483648
    %v2156 = vsel %vm2154, %v2155, %v2147
    %v2157 = vsel %vm2150, %v2153, %v2156
    %v2158 = vsel %vm2148, nan, %v2157
    %v2159 = vand.u32 2147483647, %v146
    %vm2160 = vcmp.le.f32.partialorder %v2159, 0.7853982
    %vm2161 = vcmp.lt.s32.totalorder %v146, 0
    %v2162 = vand.u32 %v146, 2139095040
    %v2163 = vshrl.u32 %v2162, 23
    %v2164 = vsub.s32 %v2163, 127
    %v2165 = vand.u32 2147483647, %v146
    %v2166 = vand.u32 %v2165, 8388607
    %v2167 = vor.u32 %v2166, 8388608
    %v2168 = vsub.s32 0, %v2167
    %v2169 = vadd.s32 %v2164, 1
    %vm2170 = vcmp.gt.s32.totalorder %v2169, 0
    %v2171 = vsel %vm2170, %v2169, 0
    %v2172 = vshrl.u32 %v2171, 5
    %v2173 = vand.u32 %v2171, 31
    %v2174 = vsub.s32 32, %v2173
    %v2175 = vshrl.u32 683565275, %v2174
    %v2176 = vshll.u32 683565275, %v2173
    %v2177 = vshrl.u32 2475754826, %v2174
    %v2178 = vor.u32 %v2176, %v2177
    %v2179 = vshll.u32 2475754826, %v2173
    %v2180 = vshrl.u32 2131351028, %v2174
    %v2181 = vor.u32 %v2179, %v2180
    %v2182 = vshll.u32 2131351028, %v2173
    %v2183 = vshrl.u32 2102212464, %v2174
    %v2184 = vor.u32 %v2182, %v2183
    %v2185 = vshll.u32 2102212464, %v2173
    %v2186 = vshrl.u32 920167782, %v2174
    %v2187 = vor.u32 %v2185, %v2186
    %v2188 = vshll.u32 920167782, %v2173
    %v2189 = vshrl.u32 1326507024, %v2174
    %v2190 = vor.u32 %v2188, %v2189
    %vm2191 = vcmp.lt.s32.totalorder %v2172, 1
    %vm2192 = vcmp.lt.s32.totalorder %v2172, 2
    %vm2193 = vcmp.lt.s32.totalorder %v2172, 3
    %vm2194 = vcmp.lt.s32.totalorder %v2172, 4
    %v2195 = vsel %vm2191, %v2175, %v2178
    %v2196 = vsel %vm2194, %v2184, 2102212464
    %v2197 = vsel %vm2193, %v2181, %v2196
    %v2198 = vsel %vm2192, %v2195, %v2197
    %v2199 = vsel %vm2191, %v2178, %v2181
    %v2200 = vsel %vm2194, %v2187, 920167782
    %v2201 = vsel %vm2193, %v2184, %v2200
    %v2202 = vsel %vm2192, %v2199, %v2201
    %v2203 = vsel %vm2191, %v2181, %v2184
    %v2204 = vsel %vm2194, %v2190, 1326507024
    %v2205 = vsel %vm2193, %v2187, %v2204
    %v2206 = vsel %vm2192, %v2203, %v2205
    %v2207 = vshll.u32 %v2167, 8
    %v2208 = vand.u32 %v2207, 65535
    %v2209 = vshrl.u32 %v2207, 16
    %v2210 = vand.u32 %v2206, 65535
    %v2211 = vshrl.u32 %v2206, 16
    %v2212 = vmul.u32 %v2208, %v2210
    %v2213 = vmul.u32 %v2208, %v2211
    %v2214 = vmul.u32 %v2209, %v2210
    %v2215 = vmul.u32 %v2209, %v2211
    %v2216 = vshll.u32 %v2213, 16
    %v2217 = vshrl.u32 %v2213, 16
    %v2218 = vshll.u32 %v2214, 16
    %v2219 = vshrl.u32 %v2214, 16
    %vm2220 = vc.u32 %v2212, %v2216
    %v2221 = vsel %vm2220, 1, 0
    %v2222 = vadd.s32 %v2212, %v2216
    %v2223 = vadd.s32 %v2215, %v2221
    %vm2224 = vc.u32 %v2222, %v2218
    %v2225 = vsel %vm2224, 1, 0
    %v2226 = vadd.s32 %v2222, %v2218
    %v2227 = vadd.s32 %v2223, %v2225
    %v2228 = vadd.s32 %v2227, %v2217
    %v2229 = vadd.s32 %v2228, %v2219
    %v2230 = vand.u32 %v2207, 65535
    %v2231 = vshrl.u32 %v2207, 16
    %v2232 = vand.u32 %v2202, 65535
    %v2233 = vshrl.u32 %v2202, 16
    %v2234 = vmul.u32 %v2230, %v2232
    %v2235 = vmul.u32 %v2230, %v2233
    %v2236 = vmul.u32 %v2231, %v2232
    %v2237 = vmul.u32 %v2231, %v2233
    %v2238 = vshll.u32 %v2235, 16
    %v2239 = vshrl.u32 %v2235, 16
    %v2240 = vshll.u32 %v2236, 16
    %v2241 = vshrl.u32 %v2236, 16
    %vm2242 = vc.u32 %v2234, %v2238
    %v2243 = vsel %vm2242, 1, 0
    %v2244 = vadd.s32 %v2234, %v2238
    %v2245 = vadd.s32 %v2237, %v2243
    %vm2246 = vc.u32 %v2244, %v2240
    %v2247 = vsel %vm2246, 1, 0
    %v2248 = vadd.s32 %v2244, %v2240
    %v2249 = vadd.s32 %v2245, %v2247
    %v2250 = vadd.s32 %v2249, %v2239
    %v2251 = vadd.s32 %v2250, %v2241
    %v2252 = vmul.u32 %v2207, %v2198
    %v2253 = vadd.s32 %v2229, %v2248
    %vm2254 = vc.u32 %v2229, %v2248
    %v2255 = vadd.s32 %v2251, 1
    %v2256 = vsel %vm2254, %v2255, %v2251
    %v2257 = vadd.s32 %v2252, %v2256
    %v2258 = vadd.s32 %v2257, 536870912
    %v2259 = vshrl.u32 %v2258, 30
    %v2260 = vshll.u32 %v2259, 30
    %v2261 = vsub.s32 %v2257, %v2260
    %vm2262 = vcmp.lt.s32.totalorder %v2261, 0
    %v2263 = vsub.s32 0, %v2261
    %v2264 = vsel %vm2262, %v2263, %v2261
    %v2265 = vclz %v2264
    %v2266 = vsub.s32 %v2265, 2
    %vm2267 = vcmp.gt.s32.totalorder 0, %v2266
    %v2268 = vsel %vm2267, 0, %v2266
    %v2269 = vsub.s32 32, %v2268
    %v2270 = vshll.u32 %v2261, %v2268
    %v2271 = vshrl.u32 %v2253, %v2269
    %v2272 = vor.u32 %v2270, %v2271
    %v2273 = vsub.s32 4294967266, %v2268
    %v2274 = vadd.s32 %v2273, 127
    %v2275 = vshll.u32 %v2274, 23
    %v2276 = vor.u32 4788187, %v2275
    %v2277 = vand.u32 2147483647, %v2276
    %v2279 = vcvt.s32.f32 %v2272
    %v2280 = vmul.f32 %v2279, %v2277
    %v2281 = vxor.u32 %v2280, 2147483648
    %v2282 = vsel %vm2161, %v2281, %v2280
    %v2283 = vsub.s32 4, %v2259
    %v2284 = vsel %vm2161, %v2283, %v2259
    %v2285 = vsel %vm2160, %v146, %v2282
    %v2286 = vsel %vm2160, 0, %v2284
    %v2287 = vmul.f32 %v2285, %v2285
    %v2288 = vmul.f32 %v2287, -0.001358992
    %v2289 = vadd.f32 %v2288, 0.041655596
    %v2290 = vmul.f32 %v2287, %v2289
    %v2291 = vadd.f32 %v2290, -0.4999988
    %v2292 = vmul.f32 %v2287, %v2291
    %v2293 = vadd.f32 1.0, %v2292
    %v2294 = vmul.f32 %v2285, %v2285
    %v2295 = vmul.f32 %v2294, -0.00019511016
    %v2296 = vadd.f32 %v2295, 0.008332121
    %v2297 = vmul.f32 %v2294, %v2296
    %v2298 = vadd.f32 %v2297, -0.16666654
    %v2299 = vmul.f32 %v2294, %v2298
    %v2300 = vadd.f32 %v2299, 1.0
    %v2301 = vmul.f32 %v2300, %v2285
    %vm2302 = vweird.f32 %v146
    %v2303 = vand.u32 %v2286, 3
    %vm2304 = vcmp.lt.s32.totalorder %v2303, 2
    %vm2305 = vcmp.eq.s32.totalorder %v2303, 0
    %v2306 = vxor.u32 %v2301, 2147483648
    %v2307 = vsel %vm2305, %v2293, %v2306
    %vm2308 = vcmp.eq.s32.totalorder %v2303, 2
    %v2309 = vxor.u32 %v2293, 2147483648
    %v2310 = vsel %vm2308, %v2309, %v2301
    %v2311 = vsel %vm2304, %v2307, %v2310
    %v2312 = vsel %vm2302, nan, %v2311
    %v2313 = vand.u32 2147483647, %v147
    %vm2314 = vcmp.le.f32.partialorder %v2313, 0.7853982
    %vm2315 = vcmp.lt.s32.totalorder %v147, 0
    %v2316 = vand.u32 %v147, 2139095040
    %v2317 = vshrl.u32 %v2316, 23
    %v2318 = vsub.s32 %v2317, 127
    %v2319 = vand.u32 2147483647, %v147
    %v2320 = vand.u32 %v2319, 8388607
    %v2321 = vor.u32 %v2320, 8388608
    %v2322 = vsub.s32 0, %v2321
    %v2323 = vadd.s32 %v2318, 1
    %vm2324 = vcmp.gt.s32.totalorder %v2323, 0
    %v2325 = vsel %vm2324, %v2323, 0
    %v2326 = vshrl.u32 %v2325, 5
    %v2327 = vand.u32 %v2325, 31
    %v2328 = vsub.s32 32, %v2327
    %v2329 = vshrl.u32 683565275, %v2328
    %v2330 = vshll.u32 683565275, %v2327
    %v2331 = vshrl.u32 2475754826, %v2328
    %v2332 = vor.u32 %v2330, %v2331
    %v2333 = vshll.u32 2475754826, %v2327
    %v2334 = vshrl.u32 2131351028, %v2328
    %v2335 = vor.u32 %v2333, %v2334
    %v2336 = vshll.u32 2131351028, %v2327
    %v2337 = vshrl.u32 2102212464, %v2328
    %v2338 = vor.u32 %v2336, %v2337
    %v2339 = vshll.u32 2102212464, %v2327
    %v2340 = vshrl.u32 920167782, %v2328
    %v2341 = vor.u32 %v2339, %v2340
    %v2342 = vshll.u32 920167782, %v2327
    %v2343 = vshrl.u32 1326507024, %v2328
    %v2344 = vor.u32 %v2342, %v2343
    %vm2345 = vcmp.lt.s32.totalorder %v2326, 1
    %vm2346 = vcmp.lt.s32.totalorder %v2326, 2
    %vm2347 = vcmp.lt.s32.totalorder %v2326, 3
    %vm2348 = vcmp.lt.s32.totalorder %v2326, 4
    %v2349 = vsel %vm2345, %v2329, %v2332
    %v2350 = vsel %vm2348, %v2338, 2102212464
    %v2351 = vsel %vm2347, %v2335, %v2350
    %v2352 = vsel %vm2346, %v2349, %v2351
    %v2353 = vsel %vm2345, %v2332, %v2335
    %v2354 = vsel %vm2348, %v2341, 920167782
    %v2355 = vsel %vm2347, %v2338, %v2354
    %v2356 = vsel %vm2346, %v2353, %v2355
    %v2357 = vsel %vm2345, %v2335, %v2338
    %v2358 = vsel %vm2348, %v2344, 1326507024
    %v2359 = vsel %vm2347, %v2341, %v2358
    %v2360 = vsel %vm2346, %v2357, %v2359
    %v2361 = vshll.u32 %v2321, 8
    %v2362 = vand.u32 %v2361, 65535
    %v2363 = vshrl.u32 %v2361, 16
    %v2364 = vand.u32 %v2360, 65535
    %v2365 = vshrl.u32 %v2360, 16
    %v2366 = vmul.u32 %v2362, %v2364
    %v2367 = vmul.u32 %v2362, %v2365
    %v2368 = vmul.u32 %v2363, %v2364
    %v2369 = vmul.u32 %v2363, %v2365
    %v2370 = vshll.u32 %v2367, 16
    %v2371 = vshrl.u32 %v2367, 16
    %v2372 = vshll.u32 %v2368, 16
    %v2373 = vshrl.u32 %v2368, 16
    %vm2374 = vc.u32 %v2366, %v2370
    %v2375 = vsel %vm2374, 1, 0
    %v2376 = vadd.s32 %v2366, %v2370
    %v2377 = vadd.s32 %v2369, %v2375
    %vm2378 = vc.u32 %v2376, %v2372
    %v2379 = vsel %vm2378, 1, 0
    %v2380 = vadd.s32 %v2376, %v2372
    %v2381 = vadd.s32 %v2377, %v2379
    %v2382 = vadd.s32 %v2381, %v2371
    %v2383 = vadd.s32 %v2382, %v2373
    %v2384 = vand.u32 %v2361, 65535
    %v2385 = vshrl.u32 %v2361, 16
    %v2386 = vand.u32 %v2356, 65535
    %v2387 = vshrl.u32 %v2356, 16
    %v2388 = vmul.u32 %v2384, %v2386
    %v2389 = vmul.u32 %v2384, %v2387
    %v2390 = vmul.u32 %v2385, %v2386
    %v2391 = vmul.u32 %v2385, %v2387
    %v2392 = vshll.u32 %v2389, 16
    %v2393 = vshrl.u32 %v2389, 16
    %v2394 = vshll.u32 %v2390, 16
    %v2395 = vshrl.u32 %v2390, 16
    %vm2396 = vc.u32 %v2388, %v2392
    %v2397 = vsel %vm2396, 1, 0
    %v2398 = vadd.s32 %v2388, %v2392
    %v2399 = vadd.s32 %v2391, %v2397
    %vm2400 = vc.u32 %v2398, %v2394
    %v2401 = vsel %vm2400, 1, 0
    %v2402 = vadd.s32 %v2398, %v2394
    %v2403 = vadd.s32 %v2399, %v2401
    %v2404 = vadd.s32 %v2403, %v2393
    %v2405 = vadd.s32 %v2404, %v2395
    %v2406 = vmul.u32 %v2361, %v2352
    %v2407 = vadd.s32 %v2383, %v2402
    %vm2408 = vc.u32 %v2383, %v2402
    %v2409 = vadd.s32 %v2405, 1
    %v2410 = vsel %vm2408, %v2409, %v2405
    %v2411 = vadd.s32 %v2406, %v2410
    %v2412 = vadd.s32 %v2411, 536870912
    %v2413 = vshrl.u32 %v2412, 30
    %v2414 = vshll.u32 %v2413, 30
    %v2415 = vsub.s32 %v2411, %v2414
    %vm2416 = vcmp.lt.s32.totalorder %v2415, 0
    %v2417 = vsub.s32 0, %v2415
    %v2418 = vsel %vm2416, %v2417, %v2415
    %v2419 = vclz %v2418
    %v2420 = vsub.s32 %v2419, 2
    %vm2421 = vcmp.gt.s32.totalorder 0, %v2420
    %v2422 = vsel %vm2421, 0, %v2420
    %v2423 = vsub.s32 32, %v2422
    %v2424 = vshll.u32 %v2415, %v2422
    %v2425 = vshrl.u32 %v2407, %v2423
    %v2426 = vor.u32 %v2424, %v2425
    %v2427 = vsub.s32 4294967266, %v2422
    %v2428 = vadd.s32 %v2427, 127
    %v2429 = vshll.u32 %v2428, 23
    %v2430 = vor.u32 4788187, %v2429
    %v2431 = vand.u32 2147483647, %v2430
    %v2433 = vcvt.s32.f32 %v2426
    %v2434 = vmul.f32 %v2433, %v2431
    %v2435 = vxor.u32 %v2434, 2147483648
    %v2436 = vsel %vm2315, %v2435, %v2434
    %v2437 = vsub.s32 4, %v2413
    %v2438 = vsel %vm2315, %v2437, %v2413
    %v2439 = vsel %vm2314, %v147, %v2436
    %v2440 = vsel %vm2314, 0, %v2438
    %v2441 = vmul.f32 %v2439, %v2439
    %v2442 = vmul.f32 %v2441, -0.001358992
    %v2443 = vadd.f32 %v2442, 0.041655596
    %v2444 = vmul.f32 %v2441, %v2443
    %v2445 = vadd.f32 %v2444, -0.4999988
    %v2446 = vmul.f32 %v2441, %v2445
    %v2447 = vadd.f32 1.0, %v2446
    %v2448 = vmul.f32 %v2439, %v2439
    %v2449 = vmul.f32 %v2448, -0.00019511016
    %v2450 = vadd.f32 %v2449, 0.008332121
    %v2451 = vmul.f32 %v2448, %v2450
    %v2452 = vadd.f32 %v2451, -0.16666654
    %v2453 = vmul.f32 %v2448, %v2452
    %v2454 = vadd.f32 %v2453, 1.0
    %v2455 = vmul.f32 %v2454, %v2439
    %vm2456 = vweird.f32 %v147
    %v2457 = vand.u32 %v2440, 3
    %vm2458 = vcmp.lt.s32.totalorder %v2457, 2
    %vm2459 = vcmp.eq.s32.totalorder %v2457, 0
    %v2460 = vxor.u32 %v2455, 2147483648
    %v2461 = vsel %vm2459, %v2447, %v2460
    %vm2462 = vcmp.eq.s32.totalorder %v2457, 2
    %v2463 = vxor.u32 %v2447, 2147483648
    %v2464 = vsel %vm2462, %v2463, %v2455
    %v2465 = vsel %vm2458, %v2461, %v2464
    %v2466 = vsel %vm2456, nan, %v2465
    %v2467 = vand.u32 2147483647, %v148
    %vm2468 = vcmp.le.f32.partialorder %v2467, 0.7853982
    %vm2469 = vcmp.lt.s32.totalorder %v148, 0
    %v2470 = vand.u32 %v148, 2139095040
    %v2471 = vshrl.u32 %v2470, 23
    %v2472 = vsub.s32 %v2471, 127
    %v2473 = vand.u32 2147483647, %v148
    %v2474 = vand.u32 %v2473, 8388607
    %v2475 = vor.u32 %v2474, 8388608
    %v2476 = vsub.s32 0, %v2475
    %v2477 = vadd.s32 %v2472, 1
    %vm2478 = vcmp.gt.s32.totalorder %v2477, 0
    %v2479 = vsel %vm2478, %v2477, 0
    %v2480 = vshrl.u32 %v2479, 5
    %v2481 = vand.u32 %v2479, 31
    %v2482 = vsub.s32 32, %v2481
    %v2483 = vshrl.u32 683565275, %v2482
    %v2484 = vshll.u32 683565275, %v2481
    %v2485 = vshrl.u32 2475754826, %v2482
    %v2486 = vor.u32 %v2484, %v2485
    %v2487 = vshll.u32 2475754826, %v2481
    %v2488 = vshrl.u32 2131351028, %v2482
    %v2489 = vor.u32 %v2487, %v2488
    %v2490 = vshll.u32 2131351028, %v2481
    %v2491 = vshrl.u32 2102212464, %v2482
    %v2492 = vor.u32 %v2490, %v2491
    %v2493 = vshll.u32 2102212464, %v2481
    %v2494 = vshrl.u32 920167782, %v2482
    %v2495 = vor.u32 %v2493, %v2494
    %v2496 = vshll.u32 920167782, %v2481
    %v2497 = vshrl.u32 1326507024, %v2482
    %v2498 = vor.u32 %v2496, %v2497
    %vm2499 = vcmp.lt.s32.totalorder %v2480, 1
    %vm2500 = vcmp.lt.s32.totalorder %v2480, 2
    %vm2501 = vcmp.lt.s32.totalorder %v2480, 3
    %vm2502 = vcmp.lt.s32.totalorder %v2480, 4
    %v2503 = vsel %vm2499, %v2483, %v2486
    %v2504 = vsel %vm2502, %v2492, 2102212464
    %v2505 = vsel %vm2501, %v2489, %v2504
    %v2506 = vsel %vm2500, %v2503, %v2505
    %v2507 = vsel %vm2499, %v2486, %v2489
    %v2508 = vsel %vm2502, %v2495, 920167782
    %v2509 = vsel %vm2501, %v2492, %v2508
    %v2510 = vsel %vm2500, %v2507, %v2509
    %v2511 = vsel %vm2499, %v2489, %v2492
    %v2512 = vsel %vm2502, %v2498, 1326507024
    %v2513 = vsel %vm2501, %v2495, %v2512
    %v2514 = vsel %vm2500, %v2511, %v2513
    %v2515 = vshll.u32 %v2475, 8
    %v2516 = vand.u32 %v2515, 65535
    %v2517 = vshrl.u32 %v2515, 16
    %v2518 = vand.u32 %v2514, 65535
    %v2519 = vshrl.u32 %v2514, 16
    %v2520 = vmul.u32 %v2516, %v2518
    %v2521 = vmul.u32 %v2516, %v2519
    %v2522 = vmul.u32 %v2517, %v2518
    %v2523 = vmul.u32 %v2517, %v2519
    %v2524 = vshll.u32 %v2521, 16
    %v2525 = vshrl.u32 %v2521, 16
    %v2526 = vshll.u32 %v2522, 16
    %v2527 = vshrl.u32 %v2522, 16
    %vm2528 = vc.u32 %v2520, %v2524
    %v2529 = vsel %vm2528, 1, 0
    %v2530 = vadd.s32 %v2520, %v2524
    %v2531 = vadd.s32 %v2523, %v2529
    %vm2532 = vc.u32 %v2530, %v2526
    %v2533 = vsel %vm2532, 1, 0
    %v2534 = vadd.s32 %v2530, %v2526
    %v2535 = vadd.s32 %v2531, %v2533
    %v2536 = vadd.s32 %v2535, %v2525
    %v2537 = vadd.s32 %v2536, %v2527
    %v2538 = vand.u32 %v2515, 65535
    %v2539 = vshrl.u32 %v2515, 16
    %v2540 = vand.u32 %v2510, 65535
    %v2541 = vshrl.u32 %v2510, 16
    %v2542 = vmul.u32 %v2538, %v2540
    %v2543 = vmul.u32 %v2538, %v2541
    %v2544 = vmul.u32 %v2539, %v2540
    %v2545 = vmul.u32 %v2539, %v2541
    %v2546 = vshll.u32 %v2543, 16
    %v2547 = vshrl.u32 %v2543, 16
    %v2548 = vshll.u32 %v2544, 16
    %v2549 = vshrl.u32 %v2544, 16
    %vm2550 = vc.u32 %v2542, %v2546
    %v2551 = vsel %vm2550, 1, 0
    %v2552 = vadd.s32 %v2542, %v2546
    %v2553 = vadd.s32 %v2545, %v2551
    %vm2554 = vc.u32 %v2552, %v2548
    %v2555 = vsel %vm2554, 1, 0
    %v2556 = vadd.s32 %v2552, %v2548
    %v2557 = vadd.s32 %v2553, %v2555
    %v2558 = vadd.s32 %v2557, %v2547
    %v2559 = vadd.s32 %v2558, %v2549
    %v2560 = vmul.u32 %v2515, %v2506
    %v2561 = vadd.s32 %v2537, %v2556
    %vm2562 = vc.u32 %v2537, %v2556
    %v2563 = vadd.s32 %v2559, 1
    %v2564 = vsel %vm2562, %v2563, %v2559
    %v2565 = vadd.s32 %v2560, %v2564
    %v2566 = vadd.s32 %v2565, 536870912
    %v2567 = vshrl.u32 %v2566, 30
    %v2568 = vshll.u32 %v2567, 30
    %v2569 = vsub.s32 %v2565, %v2568
    %vm2570 = vcmp.lt.s32.totalorder %v2569, 0
    %v2571 = vsub.s32 0, %v2569
    %v2572 = vsel %vm2570, %v2571, %v2569
    %v2573 = vclz %v2572
    %v2574 = vsub.s32 %v2573, 2
    %vm2575 = vcmp.gt.s32.totalorder 0, %v2574
    %v2576 = vsel %vm2575, 0, %v2574
    %v2577 = vsub.s32 32, %v2576
    %v2578 = vshll.u32 %v2569, %v2576
    %v2579 = vshrl.u32 %v2561, %v2577
    %v2580 = vor.u32 %v2578, %v2579
    %v2581 = vsub.s32 4294967266, %v2576
    %v2582 = vadd.s32 %v2581, 127
    %v2583 = vshll.u32 %v2582, 23
    %v2584 = vor.u32 4788187, %v2583
    %v2585 = vand.u32 2147483647, %v2584
    %v2587 = vcvt.s32.f32 %v2580
    %v2588 = vmul.f32 %v2587, %v2585
    %v2589 = vxor.u32 %v2588, 2147483648
    %v2590 = vsel %vm2469, %v2589, %v2588
    %v2591 = vsub.s32 4, %v2567
    %v2592 = vsel %vm2469, %v2591, %v2567
    %v2593 = vsel %vm2468, %v148, %v2590
    %v2594 = vsel %vm2468, 0, %v2592
    %v2595 = vmul.f32 %v2593, %v2593
    %v2596 = vmul.f32 %v2595, -0.001358992
    %v2597 = vadd.f32 %v2596, 0.041655596
    %v2598 = vmul.f32 %v2595, %v2597
    %v2599 = vadd.f32 %v2598, -0.4999988
    %v2600 = vmul.f32 %v2595, %v2599
    %v2601 = vadd.f32 1.0, %v2600
    %v2602 = vmul.f32 %v2593, %v2593
    %v2603 = vmul.f32 %v2602, -0.00019511016
    %v2604 = vadd.f32 %v2603, 0.008332121
    %v2605 = vmul.f32 %v2602, %v2604
    %v2606 = vadd.f32 %v2605, -0.16666654
    %v2607 = vmul.f32 %v2602, %v2606
    %v2608 = vadd.f32 %v2607, 1.0
    %v2609 = vmul.f32 %v2608, %v2593
    %vm2610 = vweird.f32 %v148
    %v2611 = vand.u32 %v2594, 3
    %vm2612 = vcmp.lt.s32.totalorder %v2611, 2
    %vm2613 = vcmp.eq.s32.totalorder %v2611, 0
    %v2614 = vxor.u32 %v2609, 2147483648
    %v2615 = vsel %vm2613, %v2601, %v2614
    %vm2616 = vcmp.eq.s32.totalorder %v2611, 2
    %v2617 = vxor.u32 %v2601, 2147483648
    %v2618 = vsel %vm2616, %v2617, %v2609
    %v2619 = vsel %vm2612, %v2615, %v2618
    %v2620 = vsel %vm2610, nan, %v2619
    %2621 = vrot.lane.b32.xlu0 %v1542, 1
    %v2622 = vpop.permute.xlu0 %2621
    %2623 = vrot.lane.b32.xlu0 %v1696, 1
    %v2624 = vpop.permute.xlu0 %2623
    %2625 = vrot.lane.b32.xlu0 %v1850, 1
    %v2626 = vpop.permute.xlu0 %2625
    %2627 = vrot.lane.b32.xlu0 %v2004, 1
    %v2628 = vpop.permute.xlu0 %2627
    %2629 = vrot.lane.b32.xlu0 %v2158, 1
    %v2630 = vpop.permute.xlu0 %2629
    %2631 = vrot.lane.b32.xlu0 %v2312, 1
    %v2632 = vpop.permute.xlu0 %2631
    %2633 = vrot.lane.b32.xlu0 %v2466, 1
    %v2634 = vpop.permute.xlu0 %2633
    %2635 = vrot.lane.b32.xlu0 %v2620, 1
    %v2636 = vpop.permute.xlu0 %2635
    %v2637 = vsel %vm53, %v303, %v2622
    %v2638 = vsel %vm53, %v458, %v2624
    %v2639 = vsel %vm53, %v613, %v2626
    %v2640 = vsel %vm53, %v768, %v2628
    %v2641 = vsel %vm53, %v923, %v2630
    %v2642 = vsel %vm53, %v1078, %v2632
    %v2643 = vsel %vm53, %v1233, %v2634
    %v2644 = vsel %vm53, %v1388, %v2636
    %2645 = vrot.lane.b32.xlu0 %v303, 127
    %v2646 = vpop.permute.xlu0 %2645
    %2647 = vrot.lane.b32.xlu0 %v458, 127
    %v2648 = vpop.permute.xlu0 %2647
    %2649 = vrot.lane.b32.xlu0 %v613, 127
    %v2650 = vpop.permute.xlu0 %2649
    %2651 = vrot.lane.b32.xlu0 %v768, 127
    %v2652 = vpop.permute.xlu0 %2651
    %2653 = vrot.lane.b32.xlu0 %v923, 127
    %v2654 = vpop.permute.xlu0 %2653
    %2655 = vrot.lane.b32.xlu0 %v1078, 127
    %v2656 = vpop.permute.xlu0 %2655
    %2657 = vrot.lane.b32.xlu0 %v1233, 127
    %v2658 = vpop.permute.xlu0 %2657
    %2659 = vrot.lane.b32.xlu0 %v1388, 127
    %v2660 = vpop.permute.xlu0 %2659
    %v2661 = vsel %vm53, %v2646, %v1542
    %v2662 = vsel %vm53, %v2648, %v1696
    %v2663 = vsel %vm53, %v2650, %v1850
    %v2664 = vsel %vm53, %v2652, %v2004
    %v2665 = vsel %vm53, %v2654, %v2158
    %v2666 = vsel %vm53, %v2656, %v2312
    %v2667 = vsel %vm53, %v2658, %v2466
    %v2668 = vsel %vm53, %v2660, %v2620
    %2669 = vst [vmem:[#allocation7] sm:$0xff] %v2637
    %2670 = vst [vmem:[#allocation7 + $0x8] sm:$0xff] %v2638
    %2671 = vst [vmem:[#allocation7 + $0x10] sm:$0xff] %v2639
    %2672 = vst [vmem:[#allocation7 + $0x18] sm:$0xff] %v2640
    %2673 = vst [vmem:[#allocation7 + $0x20] sm:$0xff] %v2641
    %2674 = vst [vmem:[#allocation7 + $0x28] sm:$0xff] %v2642
    %2675 = vst [vmem:[#allocation7 + $0x30] sm:$0xff] %v2643
    %2676 = vst [vmem:[#allocation7 + $0x38] sm:$0xff] %v2644
    %2677 = vst [vmem:[#allocation7 + $0x40] sm:$0xff] %v2661
    %2678 = vst [vmem:[#allocation7 + $0x48] sm:$0xff] %v2662
    %2679 = vst [vmem:[#allocation7 + $0x50] sm:$0xff] %v2663
    %2680 = vst [vmem:[#allocation7 + $0x58] sm:$0xff] %v2664
    %2681 = vst [vmem:[#allocation7 + $0x60] sm:$0xff] %v2665
    %2682 = vst [vmem:[#allocation7 + $0x68] sm:$0xff] %v2666
    %2683 = vst [vmem:[#allocation7 + $0x70] sm:$0xff] %v2667
    %2684 = vst [vmem:[#allocation7 + $0x78] sm:$0xff] %v2668
    // Predicated region
    $region18: #{tpu_custom_call.1} parent=1 // pred_check
      _
    $region19: #{tpu_custom_call.1} parent=1 // pred_check_branch
      %2686 = sbr.rel (0) target = $region21
    $region20: #{tpu_custom_call.1} parent=1 // pred_region
      %2688 = vsyncadd [#allocation4], 0
      %s2689 = sshll.u32 [#allocation7], 4
      %s2690 = int_to_ptr.vmem [resolvable:$true] %s2689
      %s2691 = sshll.u32 %s2, 4
      %s2692 = int_to_ptr.hbm [resolvable:$true] %s2691
      %2697 = dma.vmem_to_hbm [thread:$0]  %s2690, 2048, %s2692, [#allocation4], 128, 128, 8
    $region21: #{tpu_custom_call.1} parent=1 // pred_fallthru
      _
    // Predicated region
    $region22: #{tpu_custom_call.1} parent=1 // pred_check
      _
    $region23: #{tpu_custom_call.1} parent=1 // pred_check_branch
      %2699 = sbr.rel (0) target = $region25
    $region24: #{tpu_custom_call.1} parent=1 // pred_region
      %2701 = dma.done [#allocation4], 2048
    $region25: #{tpu_custom_call.1} parent=1 // pred_fallthru
      _
    %2702 = vsyncpa [#allocation3], 1
    %2703 = vsyncpa [#allocation6], 1
    %2704 = vsyncpa [#allocation4], 1

</llo_original>
